<compile_context>
chip_gen: v6e
topology: v6e:2x2x1
jax: 0.10.0
libtpu: 0.0.40
codegen_flags: <defaults>
</compile_context>

<pallas_src>
import functools

import jax
import jax.numpy as jnp
import numpy as np
from jax.experimental import pallas as pl
from jax.experimental.pallas import tpu as pltpu


# ---------------------------------------------------------------------------
# Hardware-aware configuration
# ---------------------------------------------------------------------------
def _hw_params():
    """Generation-aware tile preferences and VMEM limit (safe fallbacks)."""
    vmem_cap = 128 << 20
    name = ""
    try:
        info = pltpu.get_tpu_info()
        vmem_cap = int(getattr(info, "vmem_capacity_bytes", vmem_cap))
        for attr in ("chip_version", "version", "chip_name", "name"):
            v = getattr(info, attr, None)
            if v is not None:
                name = str(v).lower()
                break
    except Exception:
        pass
    small_vmem = vmem_cap <= (64 << 20)          # v7x: 64 MiB per TensorCore
    is_v5e = ("v5e" in name) or ("v5lite" in name) or ("v5 lite" in name)
    tq_pref = 128 if (small_vmem or is_v5e) else 256   # v5e MXU is 128-wide
    tk_pref = 256 if small_vmem else 512
    vmem_limit = max(32 << 20, min(vmem_cap * 3 // 4, 100 << 20))
    return tq_pref, tk_pref, int(vmem_limit)


def _choose_tiles(S, tq_pref, tk_pref):
    """Query/key tile sizes. Small S: untiled; large S must be 128-aligned."""
    if S <= 512:
        return S, S
    if S % 128 != 0:
        # TODO(synk): pad ragged sequence lengths to a multiple of 128 instead.
        raise ValueError(
            f"sequence length {S} must be a multiple of 128 for tiled attention")
    tq = tq_pref if S % tq_pref == 0 else 128
    tk = tk_pref if S % tk_pref == 0 else 128
    return tq, tk


# ---------------------------------------------------------------------------
# Phase 1: fused QKV projection (head-major outputs, K pre-transposed)
# ---------------------------------------------------------------------------
def _qkv_proj_kernel(x_ref, w_ref, b_ref, q_ref, kt_ref, v_ref, *, n_heads):
    _, TS, E = x_ref.shape
    H = n_heads
    d = E // H

    x = x_ref[0]                                                   # [TS, E]
    qkv = jnp.dot(x, w_ref[...],
                  preferred_element_type=jnp.float32) + b_ref[...]  # [TS, 3E] f32
    q = qkv[:, :E].reshape(TS, H, d)
    k = qkv[:, E:2 * E].reshape(TS, H, d)
    v = qkv[:, 2 * E:].reshape(TS, H, d)

    q_ref[0] = jnp.transpose(q, (1, 0, 2)).astype(q_ref.dtype)     # [H, TS, d]
    kt_ref[0] = jnp.transpose(k, (1, 2, 0)).astype(kt_ref.dtype)   # [H, d, TS]
    v_ref[0] = jnp.transpose(v, (1, 0, 2)).astype(v_ref.dtype)     # [H, TS, d]


# ---------------------------------------------------------------------------
# Phase 2: flash-style attention over key tiles (online softmax)
# ---------------------------------------------------------------------------
def _flash_attn_kernel(q_ref, kt_ref, v_ref, *rest, has_mask, approx_recip):
    if has_mask:
        mask_ref, o_ref, m_scr, l_scr, acc_scr = rest
    else:
        mask_ref = None
        o_ref, m_scr, l_scr, acc_scr = rest

    ki = pl.program_id(2)
    neg = jnp.finfo(jnp.float32).min

    @pl.when(ki == 0)
    def _():
        m_scr[...] = jnp.full_like(m_scr, -jnp.inf)
        l_scr[...] = jnp.zeros_like(l_scr)
        acc_scr[...] = jnp.zeros_like(acc_scr)

    q = q_ref[0]                                   # [H, TQ, d]   (scale pre-folded)
    k = kt_ref[0]                                  # [H, d, TK]
    s = jnp.einsum('hqd,hdk->hqk', q, k,
                   preferred_element_type=jnp.float32)             # [H, TQ, TK] f32

    if has_mask:
        # Module rearranges mask 'bsz seq -> bsz 1 seq 1': masks *query rows*,
        # broadcast over heads and key positions.  One compare, one select.
        mrow = mask_ref[0]                         # [TQ, 1]
        s = jnp.where((mrow == 0.0)[None, :, :], neg, s)

    m_prev = m_scr[...]                            # [H, TQ, 1]
    m_new = jnp.maximum(m_prev, jnp.max(s, axis=-1, keepdims=True))
    alpha = jnp.exp(m_prev - m_new)
    p = jnp.exp(s - m_new)                         # [H, TQ, TK]
    l_scr[...] = alpha * l_scr[...] + jnp.sum(p, axis=-1, keepdims=True)
    acc_scr[...] = alpha * acc_scr[...] + jnp.einsum(
        'hqk,hkd->hqd', p.astype(v_ref.dtype), v_ref[0],
        preferred_element_type=jnp.float32)        # [H, TQ, d]
    m_scr[...] = m_new

    @pl.when(ki == pl.num_programs(2) - 1)
    def _():
        H, TQ, d = acc_scr.shape
        # Normalize AFTER the PV matmul: H*TQ*d multiplies instead of H*TQ*S.
        inv_l = pl.reciprocal(l_scr[...], approx=approx_recip)      # [H, TQ, 1]
        out_h = acc_scr[...] * inv_l                                # [H, TQ, d]
        o_ref[0] = jnp.transpose(out_h, (1, 0, 2)).reshape(TQ, H * d).astype(o_ref.dtype)


# ---------------------------------------------------------------------------
# Wrapper
# ---------------------------------------------------------------------------
def attention_forward(seq, w_qkv, b_qkv, mask, *, n_heads,
                      compute_dtype=jnp.bfloat16):
    """seq: [B, S, E]; w_qkv: torch-layout [3E, E]; b_qkv: [3E]; mask: [B, S] or None."""
    B, S, E = seq.shape
    assert E % n_heads == 0
    H = n_heads
    d = E // H
    scale = d ** (-0.5)
    out_dtype = seq.dtype
    has_mask = mask is not None

    tq_pref, tk_pref, vmem_limit = _hw_params()
    TQ, TK = _choose_tiles(S, tq_pref, tk_pref)
    TS = TQ
    n_st, n_qt, n_kt = S // TS, S // TQ, S // TK

    # torch Linear: y = x @ W^T + b.  Pre-transpose and fold 1/sqrt(d) into the
    # Q columns of the weight and bias (done once at trace time, not in-kernel).
    scale_vec = jnp.concatenate(
        [jnp.full((E,), scale, jnp.float32), jnp.ones((2 * E,), jnp.float32)])
    w_t = (jnp.asarray(w_qkv).astype(jnp.float32).T
           * scale_vec[None, :]).astype(compute_dtype)              # [E, 3E]
    b_all = (jnp.asarray(b_qkv).astype(jnp.float32)
             * scale_vec).reshape(1, 3 * E)                         # [1, 3E] f32

    seq_c = seq.astype(compute_dtype)
    approx_recip = jnp.dtype(compute_dtype) != jnp.dtype(jnp.float32)
    itemsize = jnp.dtype(compute_dtype).itemsize

    # ---- Phase 1: QKV projection (head-major, K pre-transposed) -------------
    # Weights/bias are grid-invariant (constant index_map) so they are DMA'd
    # only once; no pipeline_mode needed.
    proj_cost = pl.CostEstimate(
        flops=int(2 * B * S * E * 3 * E),
        transcendentals=0,
        bytes_accessed=int((B * S * E + 3 * E * E) * itemsize + 3 * E * 4
                           + 3 * B * S * E * itemsize))
    q_hbm, kt_hbm, v_hbm = pl.pallas_call(
        functools.partial(_qkv_proj_kernel, n_heads=H),
        out_shape=(
            jax.ShapeDtypeStruct((B, H, S, d), compute_dtype),      # Q (pre-scaled)
            jax.ShapeDtypeStruct((B, H, d, S), compute_dtype),      # K^T
            jax.ShapeDtypeStruct((B, H, S, d), compute_dtype),      # V
        ),
        grid_spec=pltpu.PrefetchScalarGridSpec(
            num_scalar_prefetch=0,
            grid=(B, n_st),
            in_specs=[
                pl.BlockSpec((1, TS, E), lambda b, si: (b, si, 0)),     # seq tile
                pl.BlockSpec((E, 3 * E), lambda b, si: (0, 0)),         # W_qkv^T
                pl.BlockSpec((1, 3 * E), lambda b, si: (0, 0)),         # bias
            ],
            out_specs=(
                pl.BlockSpec((1, H, TS, d), lambda b, si: (b, 0, si, 0)),
                pl.BlockSpec((1, H, d, TS), lambda b, si: (b, 0, 0, si)),
                pl.BlockSpec((1, H, TS, d), lambda b, si: (b, 0, si, 0)),
            ),
        ),
        compiler_params=pltpu.CompilerParams(
            dimension_semantics=("parallel", "parallel"),
            vmem_limit_bytes=vmem_limit),
        cost_estimate=proj_cost,
    )(seq_c, w_t, b_all)

    # ---- Phase 2: flash attention over key tiles ----------------------------
    attn_inputs = [q_hbm, kt_hbm, v_hbm]
    in_specs = [
        pl.BlockSpec((1, H, TQ, d), lambda b, qi, ki: (b, 0, qi, 0)),   # Q tile
        pl.BlockSpec((1, H, d, TK), lambda b, qi, ki: (b, 0, 0, ki)),   # K^T tile
        pl.BlockSpec((1, H, TK, d), lambda b, qi, ki: (b, 0, ki, 0)),   # V tile
    ]
    if has_mask:
        mask3 = jnp.asarray(mask).astype(jnp.float32).reshape(B, S, 1)
        attn_inputs.append(mask3)
        in_specs.append(pl.BlockSpec((1, TQ, 1), lambda b, qi, ki: (b, qi, 0)))

    attn_cost = pl.CostEstimate(
        flops=int(4 * B * H * S * S * d),
        transcendentals=int(B * H * S * S),
        bytes_accessed=int(3 * B * S * E * itemsize + B * S * 4
                           + B * S * E * jnp.dtype(out_dtype).itemsize))

    out = pl.pallas_call(
        functools.partial(_flash_attn_kernel, has_mask=has_mask,
                          approx_recip=approx_recip),
        out_shape=jax.ShapeDtypeStruct((B, S, E), out_dtype),
        grid_spec=pltpu.PrefetchScalarGridSpec(
            num_scalar_prefetch=0,
            grid=(B, n_qt, n_kt),
            in_specs=in_specs,
            out_specs=pl.BlockSpec((1, TQ, E), lambda b, qi, ki: (b, qi, 0)),
            scratch_shapes=[
                pltpu.VMEM((H, TQ, 1), jnp.float32),   # running max m
                pltpu.VMEM((H, TQ, 1), jnp.float32),   # running denom l
                pltpu.VMEM((H, TQ, d), jnp.float32),   # unnormalized output acc
            ],
        ),
        compiler_params=pltpu.CompilerParams(
            # TODO(synk): on v7x use pltpu.CORE_PARALLEL on the batch/query axis
            # to shard across the two TensorCores (plain "parallel" only hints).
            dimension_semantics=("parallel", "parallel", "arbitrary"),
            vmem_limit_bytes=vmem_limit),
        cost_estimate=attn_cost,
    )(*attn_inputs)
    return out


# ---------------------------------------------------------------------------
# Pure-JAX mirror of the PyTorch forward, for correctness checking
# ---------------------------------------------------------------------------
def _reference_forward(seq, w_qkv, b_qkv, mask, *, n_heads):
    B, S, E = seq.shape
    d = E // n_heads
    scale = d ** (-0.5)
    qkv = seq @ w_qkv.T + b_qkv                       # [B, S, 3E]
    q, k, v = jnp.split(qkv, 3, axis=-1)
    to_heads = lambda t: t.reshape(B, S, n_heads, d).transpose(0, 2, 1, 3)
    q, k, v = map(to_heads, (q, k, v))                # [B, H, S, d]
    scores = q @ (jnp.swapaxes(k, -2, -1) * scale)    # [B, H, S, S]
    if mask is not None:
        m = mask[:, None, :, None]                    # bsz 1 seq 1
        scores = jnp.where(m == 0, jnp.finfo(scores.dtype).min, scores)
    attn = jax.nn.softmax(scores, axis=-1)
    out = attn @ v                                    # [B, H, S, d]
    return out.transpose(0, 2, 1, 3).reshape(B, S, E)


if __name__ == "__main__":
    B, S, E, H = 2, 8, 32, 4

    key = jax.random.PRNGKey(0)
    k_x, k_w, k_b, k_pw, k_pb = jax.random.split(key, 5)

    seq = jax.random.normal(k_x, (B, S, E), dtype=jnp.float32)
    # Deterministic synthetic parameters (torch param shapes: weight [out, in]).
    w_qkv = jax.random.normal(k_w, (3 * E, E), dtype=jnp.float32) * 0.1
    b_qkv = jax.random.normal(k_b, (3 * E,), dtype=jnp.float32) * 0.1
    # `proj` exists in __init__ but is never used in forward — kept for parity.
    w_proj = jax.random.normal(k_pw, (E, E), dtype=jnp.float32) * 0.1  # unused
    b_proj = jax.random.normal(k_pb, (E,), dtype=jnp.float32) * 0.1    # unused

    # Mask with some zeroed positions to exercise the masked_fill path.
    mask = jnp.ones((B, S), dtype=jnp.float32)
    mask = mask.at[0, 5].set(0.0).at[1, 2].set(0.0)

    ref = _reference_forward(seq, w_qkv, b_qkv, mask, n_heads=H)

    # Default bf16-MXU path (loose tolerance vs f32 reference).
    out_bf16 = jax.block_until_ready(
        attention_forward(seq, w_qkv, b_qkv, mask, n_heads=H))
    np.testing.assert_allclose(np.asarray(out_bf16), np.asarray(ref),
                               rtol=5e-2, atol=5e-2)

    # Full-f32 path: tight tolerance.
    out_f32 = jax.block_until_ready(
        attention_forward(seq, w_qkv, b_qkv, mask, n_heads=H,
                          compute_dtype=jnp.float32))
    np.testing.assert_allclose(np.asarray(out_f32), np.asarray(ref),
                               rtol=2e-5, atol=2e-5)

    # mask=None path (separate kernel variant without the select).
    out_nm = jax.block_until_ready(
        attention_forward(seq, w_qkv, b_qkv, None, n_heads=H,
                          compute_dtype=jnp.float32))
    ref_nm = _reference_forward(seq, w_qkv, b_qkv, None, n_heads=H)
    np.testing.assert_allclose(np.asarray(out_nm), np.asarray(ref_nm),
                               rtol=2e-5, atol=2e-5)

    print("KERNEL_OK")
</pallas_src>

<mosaic_0001>
module attributes {stable_mosaic.version = 11 : i64} {
  func.func @_qkv_proj_kernel(%arg0: i32, %arg1: i32, %arg2: memref<1x8x32xbf16, #tpu.memory_space<vmem>>, %arg3: memref<32x96xbf16, #tpu.memory_space<vmem>>, %arg4: memref<1x96xf32, #tpu.memory_space<vmem>>, %arg5: memref<1x4x8x8xbf16, #tpu.memory_space<vmem>>, %arg6: memref<1x4x8x8xbf16, #tpu.memory_space<vmem>>, %arg7: memref<1x4x8x8xbf16, #tpu.memory_space<vmem>>) attributes {dimension_semantics = [#tpu.dimension_semantics<parallel>, #tpu.dimension_semantics<parallel>], iteration_bounds = array<i64: 2, 1>, scalar_prefetch = 0 : i64, scratch_operands = 0 : i64, tpu.core_type = #tpu.core_type<tc>, window_params = [{transform_indices = @transform_0, window_bounds = array<i64: 1, 8, 32>}, {pipeline_mode = #tpu.pipeline_mode<synchronous>, transform_indices = @transform_1, window_bounds = array<i64: 32, 96>}, {pipeline_mode = #tpu.pipeline_mode<synchronous>, transform_indices = @transform_2, window_bounds = array<i64: 1, 96>}, {transform_indices = @transform_3, window_bounds = array<i64: 1, 4, 8, 8>}, {transform_indices = @transform_4, window_bounds = array<i64: 1, 4, 8, 8>}, {transform_indices = @transform_5, window_bounds = array<i64: 1, 4, 8, 8>}]} {
    %c0 = arith.constant 0 : index
    %c0_0 = arith.constant 0 : index
    %c0_1 = arith.constant 0 : index
    %0 = vector.load %arg2[%c0, %c0_0, %c0_1] : memref<1x8x32xbf16, #tpu.memory_space<vmem>>, vector<1x8x32xbf16>
    %1 = vector.shape_cast %0 : vector<1x8x32xbf16> to vector<8x32xbf16>
    %c0_2 = arith.constant 0 : index
    %c0_3 = arith.constant 0 : index
    %2 = vector.load %arg3[%c0_2, %c0_3] : memref<32x96xbf16, #tpu.memory_space<vmem>>, vector<32x96xbf16>
    %cst = arith.constant dense<0.000000e+00> : vector<8x96xf32>
    %3 = tpu.matmul %1, %2, %cst {dimension_numbers = #tpu.dot_dimension_numbers<[1], [0], [0], [1], [0, 0, 1, 1], [], []>} : vector<8x32xbf16>, vector<32x96xbf16>, vector<8x96xf32> -> vector<8x96xf32>
    %c0_4 = arith.constant 0 : index
    %c0_5 = arith.constant 0 : index
    %4 = vector.load %arg4[%c0_4, %c0_5] : memref<1x96xf32, #tpu.memory_space<vmem>>, vector<1x96xf32>
    %5 = vector.broadcast %4 : vector<1x96xf32> to vector<8x96xf32>
    %6 = arith.addf %3, %5 : vector<8x96xf32>
    %7 = vector.extract_strided_slice %6 {offsets = [0, 0], sizes = [8, 32], strides = [1, 1]} : vector<8x96xf32> to vector<8x32xf32>
    %8 = vector.shape_cast %7 : vector<8x32xf32> to vector<8x4x8xf32>
    %9 = vector.extract_strided_slice %6 {offsets = [0, 32], sizes = [8, 32], strides = [1, 1]} : vector<8x96xf32> to vector<8x32xf32>
    %10 = vector.shape_cast %9 : vector<8x32xf32> to vector<8x4x8xf32>
    %11 = vector.extract_strided_slice %6 {offsets = [0, 64], sizes = [8, 32], strides = [1, 1]} : vector<8x96xf32> to vector<8x32xf32>
    %12 = vector.shape_cast %11 : vector<8x32xf32> to vector<8x4x8xf32>
    %13 = tpu.transpose %8, [1, 0, 2] : vector<8x4x8xf32> -> vector<4x8x8xf32>
    %14 = arith.truncf %13 : vector<4x8x8xf32> to vector<4x8x8xbf16>
    %c0_6 = arith.constant 0 : index
    %c0_7 = arith.constant 0 : index
    %c0_8 = arith.constant 0 : index
    %c0_9 = arith.constant 0 : index
    %15 = vector.load %arg5[%c0_6, %c0_7, %c0_8, %c0_9] : memref<1x4x8x8xbf16, #tpu.memory_space<vmem>>, vector<1x4x8x8xbf16>
    %16 = vector.shape_cast %15 : vector<1x4x8x8xbf16> to vector<4x8x8xbf16>
    %17 = vector.shape_cast %14 : vector<4x8x8xbf16> to vector<1x4x8x8xbf16>
    tpu.vector_store %arg5[%c0_6, %c0_7, %c0_8, %c0_9], %17 {strides = array<i32>} : memref<1x4x8x8xbf16, #tpu.memory_space<vmem>>, vector<1x4x8x8xbf16>,
    %18 = tpu.transpose %10, [1, 2, 0] : vector<8x4x8xf32> -> vector<4x8x8xf32>
    %19 = arith.truncf %18 : vector<4x8x8xf32> to vector<4x8x8xbf16>
    %c0_10 = arith.constant 0 : index
    %c0_11 = arith.constant 0 : index
    %c0_12 = arith.constant 0 : index
    %c0_13 = arith.constant 0 : index
    %20 = vector.load %arg6[%c0_10, %c0_11, %c0_12, %c0_13] : memref<1x4x8x8xbf16, #tpu.memory_space<vmem>>, vector<1x4x8x8xbf16>
    %21 = vector.shape_cast %20 : vector<1x4x8x8xbf16> to vector<4x8x8xbf16>
    %22 = vector.shape_cast %19 : vector<4x8x8xbf16> to vector<1x4x8x8xbf16>
    tpu.vector_store %arg6[%c0_10, %c0_11, %c0_12, %c0_13], %22 {strides = array<i32>} : memref<1x4x8x8xbf16, #tpu.memory_space<vmem>>, vector<1x4x8x8xbf16>,
    %23 = tpu.transpose %12, [1, 0, 2] : vector<8x4x8xf32> -> vector<4x8x8xf32>
    %24 = arith.truncf %23 : vector<4x8x8xf32> to vector<4x8x8xbf16>
    %c0_14 = arith.constant 0 : index
    %c0_15 = arith.constant 0 : index
    %c0_16 = arith.constant 0 : index
    %c0_17 = arith.constant 0 : index
    %25 = vector.load %arg7[%c0_14, %c0_15, %c0_16, %c0_17] : memref<1x4x8x8xbf16, #tpu.memory_space<vmem>>, vector<1x4x8x8xbf16>
    %26 = vector.shape_cast %25 : vector<1x4x8x8xbf16> to vector<4x8x8xbf16>
    %27 = vector.shape_cast %24 : vector<4x8x8xbf16> to vector<1x4x8x8xbf16>
    tpu.vector_store %arg7[%c0_14, %c0_15, %c0_16, %c0_17], %27 {strides = array<i32>} : memref<1x4x8x8xbf16, #tpu.memory_space<vmem>>, vector<1x4x8x8xbf16>,
    return
  }
  func.func @transform_0(%arg0: i32, %arg1: i32) -> (i32, i32, i32) {
    %c0_i32 = arith.constant 0 : i32
    %c0_i32_0 = arith.constant 0 : i32
    return %arg0, %arg1, %c0_i32 : i32, i32, i32
  }
  func.func @transform_1(%arg0: i32, %arg1: i32) -> (i32, i32) {
    %c0_i32 = arith.constant 0 : i32
    %c0_i32_0 = arith.constant 0 : i32
    %c0_i32_1 = arith.constant 0 : i32
    return %c0_i32, %c0_i32_0 : i32, i32
  }
  func.func @transform_2(%arg0: i32, %arg1: i32) -> (i32, i32) {
    %c0_i32 = arith.constant 0 : i32
    %c0_i32_0 = arith.constant 0 : i32
    %c0_i32_1 = arith.constant 0 : i32
    return %c0_i32, %c0_i32_0 : i32, i32
  }
  func.func @transform_3(%arg0: i32, %arg1: i32) -> (i32, i32, i32, i32) {
    %c0_i32 = arith.constant 0 : i32
    %c0_i32_0 = arith.constant 0 : i32
    %c0_i32_1 = arith.constant 0 : i32
    return %arg0, %c0_i32, %arg1, %c0_i32_0 : i32, i32, i32, i32
  }
  func.func @transform_4(%arg0: i32, %arg1: i32) -> (i32, i32, i32, i32) {
    %c0_i32 = arith.constant 0 : i32
    %c0_i32_0 = arith.constant 0 : i32
    %c0_i32_1 = arith.constant 0 : i32
    return %arg0, %c0_i32, %c0_i32_0, %arg1 : i32, i32, i32, i32
  }
  func.func @transform_5(%arg0: i32, %arg1: i32) -> (i32, i32, i32, i32) {
    %c0_i32 = arith.constant 0 : i32
    %c0_i32_0 = arith.constant 0 : i32
    %c0_i32_1 = arith.constant 0 : i32
    return %arg0, %c0_i32, %arg1, %c0_i32_0 : i32, i32, i32, i32
  }
}

</mosaic_0001>

<llo_original>
// kernel: tpu_custom_call.1
$region0: #{tpu_custom_call.1}
  #allocation0 [shape = 'u32[]', space=smem, size = 0x4, offset = 0x4, fixed_abs, tag = 'smem constant byte address 0x4 - core index']
  #allocation1 [shape = 'u32[144,128]{1,0:T(1,128)}', space=vmem, size = 0x12000, scoped, tag = 'internal scratch']
  %s0 = inlined_call_operand.hbm [shape: bf16[2,8,32], index: 0, kind: input, shape index: {}]
  %s1 = inlined_call_operand.hbm [shape: bf16[32,96], index: 1, kind: input, shape index: {}]
  %s2 = inlined_call_operand.vmem [shape: f32[1,96], index: 2, kind: input, shape index: {}]
  %s3 = inlined_call_operand.hbm [shape: bf16[2,4,8,8], index: 3, kind: output, shape index: {0}]
  %s4 = inlined_call_operand.hbm [shape: bf16[2,4,8,8], index: 4, kind: output, shape index: {1}]
  %s5 = inlined_call_operand.hbm [shape: bf16[2,4,8,8], index: 5, kind: output, shape index: {2}]
  %6 = xla_tuple %s3, %s4, %s5
  %s7 = sld [smem:[#allocation0]]
  $region69: #{tpu_custom_call.1} parent=0
    _
  %s9 = ssub.s32 1, %s7
  %s10 = scalar_select 0, %s9, %s7
  $region1: #{tpu_custom_call.1} parent=0
    #allocation2 [shape = 'u8[4096]{0}', space=vmem, size = 0x1000, scoped, tag = 'input window, operand 0']
    #allocation3 [shape = 's32[2]{0}', space=sflag, size = 0x8, scoped, tag = 'scoped memory for tpu_custom_call.1']
    #allocation4 [shape = 's32[2]{0}', space=sflag, size = 0x8, scoped, tag = 'scoped memory for tpu_custom_call.1']
    #allocation5 [shape = 'u8[8192]{0}', space=vmem, size = 0x2000, scoped, tag = 'input window, operand 1, single buffered']
    #allocation6 [shape = 's32[1]{0}', space=sflag, size = 0x4, scoped, tag = 'scoped memory for tpu_custom_call.1']
    #allocation7 [shape = 'u8[16384]{0}', space=vmem, size = 0x4000, scoped, tag = 'output window, operand 0']
    #allocation8 [shape = 'u8[16384]{0}', space=vmem, size = 0x4000, scoped, tag = 'output window, operand 1']
    #allocation9 [shape = 's32[2]{0}', space=sflag, size = 0x8, scoped, tag = 'scoped memory for tpu_custom_call.1']
    #allocation10 [shape = 'u8[16384]{0}', space=vmem, size = 0x4000, scoped, tag = 'output window, operand 2']
    %11 = vsyncpa [#allocation3], 0
    %s12 = scalar_lea.sflag [#allocation3], 1
    %13 = vsyncpa %s12, 0
    %14 = vsyncpa [#allocation6], 0
    %15 = vsyncpa [#allocation4], 0
    %s16 = scalar_lea.sflag [#allocation4], 1
    %17 = vsyncpa %s16, 0
    %18 = vsyncpa [#allocation9], 0
    %s19 = scalar_lea.sflag [#allocation9], 1
    %20 = vsyncpa %s19, 0
    loop: start=0, step=1, limit=4
    $region2: #{tpu_custom_call.1} parent=1 // loop_pre_header
      _
    $region3: #{tpu_custom_call.1} parent=1 // loop_header
      %s22 = sphi 0, %s26
      %p23 = scmp.ge.s32.totalorder %s22, 4
      %s29 = sphi 0, %s41
      %s30 = sphi 0, %s37
      %s31 = sphi 0, %s29
      %s32 = sphi 0, %s30
      %s33 = sphi 0, %s31
      %s34 = sphi 0, %s32
      %s46 = sphi 0, %s48
      %s49 = sphi 0, %s46
      %s50 = sphi 0, %s49
      %s66 = sphi 0, %s50
      %s70 = sphi 0, %s70
      %s72 = sphi 0, %s70
      %s73 = sphi 0, %s72
      %s87 = sphi 0, %s73
      %s91 = sphi 0, %s91
      %s93 = sphi 0, %s91
      %s94 = sphi 0, %s93
      %s108 = sphi 0, %s94
      %s116 = sphi 0, %s118
      %s119 = sphi 0, %s116
      %s120 = sphi 0, %s119
      %s136 = sphi 0, %s120
      %s144 = sphi 0, %s146
      %s147 = sphi 0, %s144
      %s148 = sphi 0, %s147
      %s164 = sphi 0, %s148
      %s172 = sphi 0, %s174
      %s175 = sphi 0, %s172
      %s176 = sphi 0, %s175
      %s192 = sphi 0, %s176
    $region4: #{tpu_custom_call.1} parent=1 // loop_header_branch
      %25 = sbr.rel (%p23) target = $region8
    $region5: #{tpu_custom_call.1} parent=1 // loop_body
      %s27 = ssub.s32 %s22, 1
      %s28 = ssub.s32 %s22, 2
      %s35 = sadd.s32 1, %s30
      %p36 = scmp.ge.s32.totalorder %s35, 1
      %s37 = scalar_select %p36, 0, %s35
      %s38 = sadd.s32 1, %s29
      %s39 = scalar_select %p36, %s38, %s29
      %p40 = scmp.ge.s32.totalorder %s39, 2
      %s41 = scalar_select %p40, 0, %s39
      %s42 = ssub.s32 %s29, %s41
      %s43 = ssub.s32 %s30, %s37
      %s44 = sor.u32 %s42, %s43
      %p45 = scmp.eq.s32.totalorder %s44, 0
      %s47 = sadd.s32 %s46, 1
      %s48 = scalar_select %p45, %s46, %s47
      %p51 = pneg %p45
      %p52 = scmp.eq.s32.totalorder %s22, 1
      %p53 = por %p51, %p52
      %p54 = scmp.ne.s32.totalorder %s46, %s49
      %p55 = scmp.eq.s32.totalorder %s22, 0
      %p56 = por %p54, %p55
      %p57 = scmp.ne.s32.totalorder %s46, %s49
      %p58 = scmp.eq.s32.totalorder %s27, 1
      %p59 = por %p57, %p58
      %p60 = scmp.ne.s32.totalorder %s49, %s50
      %p61 = scmp.eq.s32.totalorder %s27, 0
      %p62 = por %p60, %p61
      %p63 = scmp.ne.s32.totalorder %s49, %s50
      %p64 = scmp.eq.s32.totalorder %s28, 1
      %p65 = por %p63, %p64
      %p67 = scmp.ne.s32.totalorder %s50, %s66
      %p68 = scmp.eq.s32.totalorder %s28, 0
      %p69 = por %p67, %p68
      %s71 = sadd.s32 %s70, 1
      %p74 = scmp.eq.s32.totalorder %s22, 1
      %p75 = scmp.ne.s32.totalorder %s70, %s72
      %p76 = scmp.eq.s32.totalorder %s22, 0
      %p77 = por %p75, %p76
      %p78 = scmp.ne.s32.totalorder %s70, %s72
      %p79 = scmp.eq.s32.totalorder %s27, 1
      %p80 = por %p78, %p79
      %p81 = scmp.ne.s32.totalorder %s72, %s73
      %p82 = scmp.eq.s32.totalorder %s27, 0
      %p83 = por %p81, %p82
      %p84 = scmp.ne.s32.totalorder %s72, %s73
      %p85 = scmp.eq.s32.totalorder %s28, 1
      %p86 = por %p84, %p85
      %p88 = scmp.ne.s32.totalorder %s73, %s87
      %p89 = scmp.eq.s32.totalorder %s28, 0
      %p90 = por %p88, %p89
      %s92 = sadd.s32 %s91, 1
      %p95 = scmp.eq.s32.totalorder %s22, 1
      %p96 = scmp.ne.s32.totalorder %s91, %s93
      %p97 = scmp.eq.s32.totalorder %s22, 0
      %p98 = por %p96, %p97
      %p99 = scmp.ne.s32.totalorder %s91, %s93
      %p100 = scmp.eq.s32.totalorder %s27, 1
      %p101 = por %p99, %p100
      %p102 = scmp.ne.s32.totalorder %s93, %s94
      %p103 = scmp.eq.s32.totalorder %s27, 0
      %p104 = por %p102, %p103
      %p105 = scmp.ne.s32.totalorder %s93, %s94
      %p106 = scmp.eq.s32.totalorder %s28, 1
      %p107 = por %p105, %p106
      %p109 = scmp.ne.s32.totalorder %s94, %s108
      %p110 = scmp.eq.s32.totalorder %s28, 0
      %p111 = por %p109, %p110
      %s112 = ssub.s32 %s29, %s41
      %s113 = ssub.s32 %s30, %s37
      %s114 = sor.u32 %s112, %s113
      %p115 = scmp.eq.s32.totalorder %s114, 0
      %s117 = sadd.s32 %s116, 1
      %s118 = scalar_select %p115, %s116, %s117
      %p121 = pneg %p115
      %p122 = scmp.eq.s32.totalorder %s22, 1
      %p123 = por %p121, %p122
      %p124 = scmp.ne.s32.totalorder %s116, %s119
      %p125 = scmp.eq.s32.totalorder %s22, 0
      %p126 = por %p124, %p125
      %p127 = scmp.ne.s32.totalorder %s116, %s119
      %p128 = scmp.eq.s32.totalorder %s27, 1
      %p129 = por %p127, %p128
      %p130 = scmp.ne.s32.totalorder %s119, %s120
      %p131 = scmp.eq.s32.totalorder %s27, 0
      %p132 = por %p130, %p131
      %p133 = scmp.ne.s32.totalorder %s119, %s120
      %p134 = scmp.eq.s32.totalorder %s28, 1
      %p135 = por %p133, %p134
      %p137 = scmp.ne.s32.totalorder %s120, %s136
      %p138 = scmp.eq.s32.totalorder %s28, 0
      %p139 = por %p137, %p138
      %s140 = ssub.s32 %s29, %s41
      %s141 = ssub.s32 %s30, %s37
      %s142 = sor.u32 %s140, %s141
      %p143 = scmp.eq.s32.totalorder %s142, 0
      %s145 = sadd.s32 %s144, 1
      %s146 = scalar_select %p143, %s144, %s145
      %p149 = pneg %p143
      %p150 = scmp.eq.s32.totalorder %s22, 1
      %p151 = por %p149, %p150
      %p152 = scmp.ne.s32.totalorder %s144, %s147
      %p153 = scmp.eq.s32.totalorder %s22, 0
      %p154 = por %p152, %p153
      %p155 = scmp.ne.s32.totalorder %s144, %s147
      %p156 = scmp.eq.s32.totalorder %s27, 1
      %p157 = por %p155, %p156
      %p158 = scmp.ne.s32.totalorder %s147, %s148
      %p159 = scmp.eq.s32.totalorder %s27, 0
      %p160 = por %p158, %p159
      %p161 = scmp.ne.s32.totalorder %s147, %s148
      %p162 = scmp.eq.s32.totalorder %s28, 1
      %p163 = por %p161, %p162
      %p165 = scmp.ne.s32.totalorder %s148, %s164
      %p166 = scmp.eq.s32.totalorder %s28, 0
      %p167 = por %p165, %p166
      %s168 = ssub.s32 %s29, %s41
      %s169 = ssub.s32 %s30, %s37
      %s170 = sor.u32 %s168, %s169
      %p171 = scmp.eq.s32.totalorder %s170, 0
      %s173 = sadd.s32 %s172, 1
      %s174 = scalar_select %p171, %s172, %s173
      %p177 = pneg %p171
      %p178 = scmp.eq.s32.totalorder %s22, 1
      %p179 = por %p177, %p178
      %p180 = scmp.ne.s32.totalorder %s172, %s175
      %p181 = scmp.eq.s32.totalorder %s22, 0
      %p182 = por %p180, %p181
      %p183 = scmp.ne.s32.totalorder %s172, %s175
      %p184 = scmp.eq.s32.totalorder %s27, 1
      %p185 = por %p183, %p184
      %p186 = scmp.ne.s32.totalorder %s175, %s176
      %p187 = scmp.eq.s32.totalorder %s27, 0
      %p188 = por %p186, %p187
      %p189 = scmp.ne.s32.totalorder %s175, %s176
      %p190 = scmp.eq.s32.totalorder %s28, 1
      %p191 = por %p189, %p190
      %p193 = scmp.ne.s32.totalorder %s176, %s192
      %p194 = scmp.eq.s32.totalorder %s28, 0
      %p195 = por %p193, %p194
      %p196 = scmp.le.s32.totalorder 1, %s22
      %p197 = scmp.lt.s32.totalorder %s22, 3
      %p198 = pnand %p196, %p197
      %p199 = pneg %p198
      // Predicated region
      $region9: #{tpu_custom_call.1} parent=5 // pred_check
        _
      $region10: #{tpu_custom_call.1} parent=5 // pred_check_branch
        %201 = sbr.rel (%p198) target = $region12
      $region11: #{tpu_custom_call.1} parent=5 // pred_region
        %s202 = ssub.s32 %s22, 1
        // Predicated region
        $region13: #{tpu_custom_call.1} parent=11 // pred_check
          %p203 = pneg %p83
        $region14: #{tpu_custom_call.1} parent=11 // pred_check_branch
          %205 = sbr.rel (%p203) target = $region16
        $region15: #{tpu_custom_call.1} parent=11 // pred_region
          %s207 = ssub.s32 256, 256
          %208 = vsyncadd [#allocation6], %s207
          %s209 = sshll.u32 [#allocation5], 4
          %s210 = int_to_ptr.vmem [resolvable:$true] %s209
          %215 = dma.hbm_to_vmem [thread:$0]  %s1, 256, %s210, [#allocation6], 64, 64, 4
        $region16: #{tpu_custom_call.1} parent=11 // pred_fallthru
          _
        // Predicated region
        $region17: #{tpu_custom_call.1} parent=11 // pred_check
          %p216 = pneg %p104
        $region18: #{tpu_custom_call.1} parent=11 // pred_check_branch
          %218 = sbr.rel (%p216) target = $region20
        $region19: #{tpu_custom_call.1} parent=11 // pred_region
          _
        $region20: #{tpu_custom_call.1} parent=11 // pred_fallthru
          _
      $region12: #{tpu_custom_call.1} parent=5 // pred_fallthru
        _
      %p219 = scmp.lt.s32.totalorder %s22, 2
      // Predicated region
      $region21: #{tpu_custom_call.1} parent=5 // pred_check
        %p220 = pneg %p219
      $region22: #{tpu_custom_call.1} parent=5 // pred_check_branch
        %222 = sbr.rel (%p220) target = $region24
      $region23: #{tpu_custom_call.1} parent=5 // pred_region
        // Predicated region
        $region25: #{tpu_custom_call.1} parent=23 // pred_check
          %p223 = pneg %p56
        $region26: #{tpu_custom_call.1} parent=23 // pred_check_branch
          %225 = sbr.rel (%p223) target = $region28
        $region27: #{tpu_custom_call.1} parent=23 // pred_region
          %s226 = sand.u32 %s46, 1
          %s227 = scalar_lea.sflag [#allocation3], %s226
          %s228 = sand.u32 %s46, 1
          %s229 = smul.addr %s228, 4
          %s230 = scalar_lea.vmem [#allocation2], %s229
          %s232 = ssub.s32 64, 64
          %233 = vsyncadd %s227, %s232
          %s234 = sadd.s32 %s30, %s29
          %s235 = smul.addr %s234, 64
          %s236 = scalar_lea.hbm %s0, %s235
          %s238 = sshll.u32 %s230, 4
          %s239 = int_to_ptr.vmem [resolvable:$true] %s238
          %241 = dma.hbm_to_vmem [thread:$0]  %s236, 64, %s239, %s227
        $region28: #{tpu_custom_call.1} parent=23 // pred_fallthru
          _
      $region24: #{tpu_custom_call.1} parent=5 // pred_fallthru
        _
      %p242 = scmp.le.s32.totalorder 1, %s22
      %p243 = scmp.lt.s32.totalorder %s22, 3
      %p244 = pnand %p242, %p243
      %p245 = pneg %p244
      // Predicated region
      $region29: #{tpu_custom_call.1} parent=5 // pred_check
        _
      $region30: #{tpu_custom_call.1} parent=5 // pred_check_branch
        %247 = sbr.rel (%p244) target = $region32
      $region31: #{tpu_custom_call.1} parent=5 // pred_region
        %s248 = ssub.s32 %s22, 1
        %s249 = sand.u32 %s49, 1
        %s250 = scalar_lea.sflag [#allocation3], %s249
        %s251 = sand.u32 %s49, 1
        %s252 = smul.addr %s251, 4
        %s253 = scalar_lea.vmem [#allocation2], %s252
        // Predicated region
        $region33: #{tpu_custom_call.1} parent=31 // pred_check
          %p254 = pneg %p62
        $region34: #{tpu_custom_call.1} parent=31 // pred_check_branch
          %256 = sbr.rel (%p254) target = $region36
        $region35: #{tpu_custom_call.1} parent=31 // pred_region
          %257 = dma.done %s250, 64
        $region36: #{tpu_custom_call.1} parent=31 // pred_fallthru
          _
        // Predicated region
        $region37: #{tpu_custom_call.1} parent=31 // pred_check
          %p258 = pneg %p83
        $region38: #{tpu_custom_call.1} parent=31 // pred_check_branch
          %260 = sbr.rel (%p258) target = $region40
        $region39: #{tpu_custom_call.1} parent=31 // pred_region
          %261 = dma.done [#allocation6], 256
        $region40: #{tpu_custom_call.1} parent=31 // pred_fallthru
          _
        %s262 = sand.u32 %s49, 1
        %s263 = scalar_lea.sflag [#allocation3], %s262
        %s264 = sand.u32 %s49, 1
        %s265 = smul.addr %s264, 4
        %s266 = scalar_lea.vmem [#allocation2], %s265
        %p267 = pneg %p62
        %p268 = pneg %p59
        %p269 = pneg %p83
        %p270 = pneg %p80
        %p271 = pneg %p104
        %p272 = pneg %p101
        %p273 = pneg %p132
        %p274 = pneg %p129
        %s275 = sand.u32 %s119, 1
        %s276 = scalar_lea.sflag [#allocation4], %s275
        %s277 = sand.u32 %s119, 1
        %s278 = smul.addr %s277, 16
        %s279 = scalar_lea.vmem [#allocation7], %s278
        %p280 = pneg %p160
        %p281 = pneg %p157
        %s282 = sand.u32 %s27, 1
        %s283 = scalar_lea.sflag [#allocation9], %s282
        %s284 = sand.u32 %s147, 1
        %s285 = smul.addr %s284, 16
        %s286 = scalar_lea.vmem [#allocation8], %s285
        %p287 = pneg %p188
        %p288 = pneg %p185
        %s289 = sand.u32 %s27, 1
        %s290 = scalar_lea.sflag [#allocation9], %s289
        %s291 = sand.u32 %s175, 1
        %s292 = smul.addr %s291, 16
        %s293 = scalar_lea.vmem [#allocation10], %s292
        %v295 = vld [vmem:[%s253] sm:$0xf]
        %v296 = vld [vmem:[#allocation5] sm:$0xf]
        %v297 = vld [vmem:[#allocation5 + $0x4] sm:$0xf]
        %v298 = vld [vmem:[#allocation5 + $0x8] sm:$0xf]
        %v299 = vld [vmem:[#allocation5 + $0xc] sm:$0xf]
        %v300 = vld [vmem:[%s2] sm:$0x1]
        %v302 = vlaneseq
        %v303 = vshrl.u32 %v302, 7
        %v304 = vsub.s32 0, %v303
        %v305 = vrot.slane %v300, %v304
        %v311 = vunpack.c.l.b16 %v296
        %v312 = vunpack.c.l.b16 %v297
        %v313 = vunpack.c.l.b16 %v298
        %v314 = vunpack.c.l.b16 %v299
        %v315 = vpack.c.b16 %v312, %v311
        %v316 = vpack.c.b16 %v314, %v313
        %vm319 = vcmask 261120
        %v321 = vsel %vm319, %v295, 0
        %323 = vmatprep.subr.bf16.mxu0 0
        %324 = vmatpush1.bf16.msra.mxu0 0
        %325 = vmatprep.subr.bf16.mxu0 0
        %326 = vmatpush1.bf16.msra.mxu0 0
        %327 = vmatprep.subr.bf16.mxu0 0
        %328 = vmatpush1.bf16.msra.mxu0 0
        %329 = vmatprep.subr.bf16.mxu0 0
        %330 = vmatpush1.bf16.msra.mxu0 0
        %331 = vmatprep.subr.bf16.mxu0 0
        %332 = vmatpush1.bf16.msra.mxu0 0
        %333 = vmatprep.subr.bf16.mxu0 0
        %334 = vmatpush1.bf16.msra.mxu0 0
        %335 = vmatprep.subr.bf16.mxu0 0
        %336 = vmatpush1.bf16.msra.mxu0 %v316
        %337 = vmatprep.subr.bf16.mxu0 0
        %338 = vmatpush1.bf16.msra.mxu0 %v315
        %339 = vmatprep.subr.bf16.mxu0 0
        %340 = vmatpush2.bf16.msra.mxu0 0
        %341 = vmatprep.subr.bf16.mxu0 0
        %342 = vmatpush2.bf16.msra.mxu0 0
        %343 = vmatprep.subr.bf16.mxu0 0
        %344 = vmatpush2.bf16.msra.mxu0 0
        %345 = vmatprep.subr.bf16.mxu0 0
        %346 = vmatpush2.bf16.msra.mxu0 0
        %347 = vmatprep.subr.bf16.mxu0 0
        %348 = vmatpush2.bf16.msra.mxu0 0
        %349 = vmatprep.subr.bf16.mxu0 0
        %350 = vmatpush2.bf16.msra.mxu0 0
        %351 = vmatprep.subr.bf16.mxu0 0
        %352 = vmatpush2.bf16.msra.mxu0 0
        %353 = vmatprep.subr.bf16.mxu0 0
        %354 = vmatpush2.bf16.msra.mxu0 0
        %355 = vmatprep.mubr.bf16.mxu0 0
        %356 = vmatmul.mubr.bf16.gmra.mxu0 %v321
        %v357 = vpop.f32.mrf.mxu0
        %v358 = vadd.f32 %v305, %v357
        %v359 = vpop.f32.mrf.mxu0
        %v360 = vpop.f32.mrf.mxu0
        %v361 = vpop.f32.mrf.mxu0
        %362 = vdwg.mxu0
        %364 = vrot.lane.b32.xlu0 %v358, 120
        %v365 = vpop.permute.xlu0 %364
        %367 = vrot.lane.b32.xlu0 %v358, 112
        %v368 = vpop.permute.xlu0 %367
        %370 = vrot.lane.b32.xlu0 %v358, 104
        %v371 = vpop.permute.xlu0 %370
        %v373 = vcombine.low %v358, %v368
        %v374 = vcombine.high %v358, %v368
        %v376 = vunpack.c.l.s4 1983009808
        %v377 = vunpack.c.0.s8 %v376
        %v378 = vlaneseq
        %v379 = vshrl.u32 %v378, 7
        %v380 = vsub.s32 %v377, %v379
        %v381 = vrot.slane %v373, %v380
        %v383 = vunpack.c.l.s4 1983009808
        %v384 = vunpack.c.0.s8 %v383
        %v385 = vlaneseq
        %v386 = vshrl.u32 %v385, 7
        %v387 = vsub.s32 %v384, %v386
        %v388 = vrot.slane %v374, %v387
        %v389 = vcombine.low %v365, %v371
        %v390 = vcombine.high %v365, %v371
        %v392 = vunpack.c.l.s4 1983009808
        %v393 = vunpack.c.0.s8 %v392
        %v394 = vlaneseq
        %v395 = vshrl.u32 %v394, 7
        %v396 = vsub.s32 %v393, %v395
        %v397 = vrot.slane %v389, %v396
        %v399 = vunpack.c.l.s4 1983009808
        %v400 = vunpack.c.0.s8 %v399
        %v401 = vlaneseq
        %v402 = vshrl.u32 %v401, 7
        %v403 = vsub.s32 %v400, %v402
        %v404 = vrot.slane %v390, %v403
        %v405 = vcombine.low %v381, %v397
        %v406 = vcombine.high %v381, %v397
        %v408 = vunpack.c.l.s4 1934713408
        %v409 = vunpack.c.0.s8 %v408
        %v410 = vlaneseq
        %v411 = vshrl.u32 %v410, 7
        %v412 = vsub.s32 %v409, %v411
        %v413 = vrot.slane %v405, %v412
        %v415 = vunpack.c.l.s4 1934713408
        %v416 = vunpack.c.0.s8 %v415
        %v417 = vlaneseq
        %v418 = vshrl.u32 %v417, 7
        %v419 = vsub.s32 %v416, %v418
        %v420 = vrot.slane %v406, %v419
        %v421 = vcombine.low %v388, %v404
        %v422 = vcombine.high %v388, %v404
        %v424 = vunpack.c.l.s4 1934713408
        %v425 = vunpack.c.0.s8 %v424
        %v426 = vlaneseq
        %v427 = vshrl.u32 %v426, 7
        %v428 = vsub.s32 %v425, %v427
        %v429 = vrot.slane %v421, %v428
        %v431 = vunpack.c.l.s4 1934713408
        %v432 = vunpack.c.0.s8 %v431
        %v433 = vlaneseq
        %v434 = vshrl.u32 %v433, 7
        %v435 = vsub.s32 %v432, %v434
        %v436 = vrot.slane %v422, %v435
        %v437 = vcombine.high %v413, 0.0
        %v438 = vcombine.high %v420, 0.0
        %v439 = vcombine.high %v429, 0.0
        %v440 = vcombine.high %v436, 0.0
        %441 = vrot.lane.b32.xlu0 %v358, 96
        %v442 = vpop.permute.xlu0 %441
        %443 = vrot.lane.b32.xlu0 %v365, 96
        %v444 = vpop.permute.xlu0 %443
        %445 = vrot.lane.b32.xlu0 %v368, 96
        %v446 = vpop.permute.xlu0 %445
        %447 = vrot.lane.b32.xlu0 %v371, 96
        %v448 = vpop.permute.xlu0 %447
        %v453 = vcombine.low %v442, %v446
        %v454 = vcombine.high %v442, %v446
        %v456 = vunpack.c.l.s4 1983009808
        %v457 = vunpack.c.0.s8 %v456
        %v458 = vlaneseq
        %v459 = vshrl.u32 %v458, 7
        %v460 = vsub.s32 %v457, %v459
        %v461 = vrot.slane %v453, %v460
        %v463 = vunpack.c.l.s4 1983009808
        %v464 = vunpack.c.0.s8 %v463
        %v465 = vlaneseq
        %v466 = vshrl.u32 %v465, 7
        %v467 = vsub.s32 %v464, %v466
        %v468 = vrot.slane %v454, %v467
        %v469 = vcombine.low %v444, %v448
        %v470 = vcombine.high %v444, %v448
        %v472 = vunpack.c.l.s4 1983009808
        %v473 = vunpack.c.0.s8 %v472
        %v474 = vlaneseq
        %v475 = vshrl.u32 %v474, 7
        %v476 = vsub.s32 %v473, %v475
        %v477 = vrot.slane %v469, %v476
        %v479 = vunpack.c.l.s4 1983009808
        %v480 = vunpack.c.0.s8 %v479
        %v481 = vlaneseq
        %v482 = vshrl.u32 %v481, 7
        %v483 = vsub.s32 %v480, %v482
        %v484 = vrot.slane %v470, %v483
        %v485 = vcombine.low %v461, %v477
        %v486 = vcombine.high %v461, %v477
        %v488 = vunpack.c.l.s4 1934713408
        %v489 = vunpack.c.0.s8 %v488
        %v490 = vlaneseq
        %v491 = vshrl.u32 %v490, 7
        %v492 = vsub.s32 %v489, %v491
        %v493 = vrot.slane %v485, %v492
        %v495 = vunpack.c.l.s4 1934713408
        %v496 = vunpack.c.0.s8 %v495
        %v497 = vlaneseq
        %v498 = vshrl.u32 %v497, 7
        %v499 = vsub.s32 %v496, %v498
        %v500 = vrot.slane %v486, %v499
        %v501 = vcombine.low %v468, %v484
        %v502 = vcombine.high %v468, %v484
        %v504 = vunpack.c.l.s4 1934713408
        %v505 = vunpack.c.0.s8 %v504
        %v506 = vlaneseq
        %v507 = vshrl.u32 %v506, 7
        %v508 = vsub.s32 %v505, %v507
        %v509 = vrot.slane %v501, %v508
        %v511 = vunpack.c.l.s4 1934713408
        %v512 = vunpack.c.0.s8 %v511
        %v513 = vlaneseq
        %v514 = vshrl.u32 %v513, 7
        %v515 = vsub.s32 %v512, %v514
        %v516 = vrot.slane %v502, %v515
        %v517 = vcombine.high %v493, 0.0
        %v518 = vcombine.high %v500, 0.0
        %v519 = vcombine.high %v509, 0.0
        %v520 = vcombine.high %v516, 0.0
        %521 = vrot.lane.b32.xlu0 %v358, 64
        %v522 = vpop.permute.xlu0 %521
        %523 = vrot.lane.b32.xlu0 %v365, 64
        %v524 = vpop.permute.xlu0 %523
        %525 = vrot.lane.b32.xlu0 %v368, 64
        %v526 = vpop.permute.xlu0 %525
        %527 = vrot.lane.b32.xlu0 %v371, 64
        %v528 = vpop.permute.xlu0 %527
        %v533 = vcombine.low %v522, %v526
        %v534 = vcombine.high %v522, %v526
        %v536 = vunpack.c.l.s4 1983009808
        %v537 = vunpack.c.0.s8 %v536
        %v538 = vlaneseq
        %v539 = vshrl.u32 %v538, 7
        %v540 = vsub.s32 %v537, %v539
        %v541 = vrot.slane %v533, %v540
        %v543 = vunpack.c.l.s4 1983009808
        %v544 = vunpack.c.0.s8 %v543
        %v545 = vlaneseq
        %v546 = vshrl.u32 %v545, 7
        %v547 = vsub.s32 %v544, %v546
        %v548 = vrot.slane %v534, %v547
        %v549 = vcombine.low %v524, %v528
        %v550 = vcombine.high %v524, %v528
        %v552 = vunpack.c.l.s4 1983009808
        %v553 = vunpack.c.0.s8 %v552
        %v554 = vlaneseq
        %v555 = vshrl.u32 %v554, 7
        %v556 = vsub.s32 %v553, %v555
        %v557 = vrot.slane %v549, %v556
        %v559 = vunpack.c.l.s4 1983009808
        %v560 = vunpack.c.0.s8 %v559
        %v561 = vlaneseq
        %v562 = vshrl.u32 %v561, 7
        %v563 = vsub.s32 %v560, %v562
        %v564 = vrot.slane %v550, %v563
        %v565 = vcombine.low %v541, %v557
        %v566 = vcombine.high %v541, %v557
        %v568 = vunpack.c.l.s4 1934713408
        %v569 = vunpack.c.0.s8 %v568
        %v570 = vlaneseq
        %v571 = vshrl.u32 %v570, 7
        %v572 = vsub.s32 %v569, %v571
        %v573 = vrot.slane %v565, %v572
        %v575 = vunpack.c.l.s4 1934713408
        %v576 = vunpack.c.0.s8 %v575
        %v577 = vlaneseq
        %v578 = vshrl.u32 %v577, 7
        %v579 = vsub.s32 %v576, %v578
        %v580 = vrot.slane %v566, %v579
        %v581 = vcombine.low %v548, %v564
        %v582 = vcombine.high %v548, %v564
        %v584 = vunpack.c.l.s4 1934713408
        %v585 = vunpack.c.0.s8 %v584
        %v586 = vlaneseq
        %v587 = vshrl.u32 %v586, 7
        %v588 = vsub.s32 %v585, %v587
        %v589 = vrot.slane %v581, %v588
        %v591 = vunpack.c.l.s4 1934713408
        %v592 = vunpack.c.0.s8 %v591
        %v593 = vlaneseq
        %v594 = vshrl.u32 %v593, 7
        %v595 = vsub.s32 %v592, %v594
        %v596 = vrot.slane %v582, %v595
        %v597 = vcombine.high %v573, 0.0
        %v598 = vcombine.high %v580, 0.0
        %v599 = vcombine.high %v589, 0.0
        %v600 = vcombine.high %v596, 0.0
        %v601 = vcombine.low %v413, %v420
        %v603 = vunpack.c.l.s4 1983009808
        %v604 = vunpack.c.0.s8 %v603
        %v605 = vlaneseq
        %v606 = vshrl.u32 %v605, 7
        %v607 = vsub.s32 %v604, %v606
        %v608 = vrot.slane %v601, %v607
        %v609 = vcombine.low %v437, %v438
        %v611 = vunpack.c.l.s4 1983009808
        %v612 = vunpack.c.0.s8 %v611
        %v613 = vlaneseq
        %v614 = vshrl.u32 %v613, 7
        %v615 = vsub.s32 %v612, %v614
        %v616 = vrot.slane %v609, %v615
        %v617 = vcombine.low %v429, %v436
        %v619 = vunpack.c.l.s4 1983009808
        %v620 = vunpack.c.0.s8 %v619
        %v621 = vlaneseq
        %v622 = vshrl.u32 %v621, 7
        %v623 = vsub.s32 %v620, %v622
        %v624 = vrot.slane %v617, %v623
        %v625 = vcombine.low %v439, %v440
        %v627 = vunpack.c.l.s4 1983009808
        %v628 = vunpack.c.0.s8 %v627
        %v629 = vlaneseq
        %v630 = vshrl.u32 %v629, 7
        %v631 = vsub.s32 %v628, %v630
        %v632 = vrot.slane %v625, %v631
        %v633 = vcombine.low %v608, %v616
        %v634 = vcombine.high %v608, %v616
        %v636 = vunpack.c.l.s4 1934713408
        %v637 = vunpack.c.0.s8 %v636
        %v638 = vlaneseq
        %v639 = vshrl.u32 %v638, 7
        %v640 = vsub.s32 %v637, %v639
        %v641 = vrot.slane %v633, %v640
        %v643 = vunpack.c.l.s4 1934713408
        %v644 = vunpack.c.0.s8 %v643
        %v645 = vlaneseq
        %v646 = vshrl.u32 %v645, 7
        %v647 = vsub.s32 %v644, %v646
        %v648 = vrot.slane %v634, %v647
        %v649 = vcombine.low %v624, %v632
        %v650 = vcombine.high %v624, %v632
        %v652 = vunpack.c.l.s4 1934713408
        %v653 = vunpack.c.0.s8 %v652
        %v654 = vlaneseq
        %v655 = vshrl.u32 %v654, 7
        %v656 = vsub.s32 %v653, %v655
        %v657 = vrot.slane %v649, %v656
        %v659 = vunpack.c.l.s4 1934713408
        %v660 = vunpack.c.0.s8 %v659
        %v661 = vlaneseq
        %v662 = vshrl.u32 %v661, 7
        %v663 = vsub.s32 %v660, %v662
        %v664 = vrot.slane %v650, %v663
        %v665 = vcombine.low %v641, %v657
        %v666 = vcombine.high %v641, %v657
        %v667 = vcombine.low %v648, %v664
        %v668 = vcombine.high %v648, %v664
        %v669 = vpack.c.bf16 %v665, %v665
        %v670 = vpack.c.bf16 %v666, %v666
        %v671 = vpack.c.bf16 %v667, %v667
        %v672 = vpack.c.bf16 %v668, %v668
        %vm673 = vcmask 60416
        %674 = vst.msk [vmem:[%s279] sm:$0xf] %vm673, %v669
        %675 = vst.msk [vmem:[%s279 + $0x4] sm:$0xf] %vm673, %v670
        %676 = vst.msk [vmem:[%s279 + $0x8] sm:$0xf] %vm673, %v671
        %677 = vst.msk [vmem:[%s279 + $0xc] sm:$0xf] %vm673, %v672
        %678 = vxpose.xlu0.b32.start [1/16] %v493, 128
        %679 = vxpose.xlu0.b32.cont [2/16] 0.0, 128
        %680 = vxpose.xlu0.b32.cont [3/16] 0.0, 128
        %681 = vxpose.xlu0.b32.cont [4/16] 0.0, 128
        %682 = vxpose.xlu0.b32.cont [5/16] 0.0, 128
        %683 = vxpose.xlu0.b32.cont [6/16] 0.0, 128
        %684 = vxpose.xlu0.b32.cont [7/16] 0.0, 128
        %685 = vxpose.xlu0.b32.cont [8/16] 0.0, 128
        %686 = vxpose.xlu0.b32.cont [9/16] 0.0, 128
        %687 = vxpose.xlu0.b32.cont [10/16] 0.0, 128
        %688 = vxpose.xlu0.b32.cont [11/16] 0.0, 128
        %689 = vxpose.xlu0.b32.cont [12/16] 0.0, 128
        %690 = vxpose.xlu0.b32.cont [13/16] 0.0, 128
        %691 = vxpose.xlu0.b32.cont [14/16] 0.0, 128
        %692 = vxpose.xlu0.b32.cont [15/16] 0.0, 128
        %693 = vxpose.xlu0.b32.end [16/16] 0.0, 128
        %v694 = vpop.trf.xlu0
        %v695 = vpop.trf.xlu0
        %v696 = vpop.trf.xlu0
        %v697 = vpop.trf.xlu0
        %v698 = vpop.trf.xlu0
        %v699 = vpop.trf.xlu0
        %v700 = vpop.trf.xlu0
        %v701 = vpop.trf.xlu0
        %v702 = vpop.trf.xlu0
        %v703 = vpop.trf.xlu0
        %v704 = vpop.trf.xlu0
        %v705 = vpop.trf.xlu0
        %v706 = vpop.trf.xlu0
        %v707 = vpop.trf.xlu0
        %v708 = vpop.trf.xlu0
        %v709 = vpop.trf.xlu0
        %710 = vxpose.xlu0.b32.start [1/16] %v517, 128
        %711 = vxpose.xlu0.b32.cont [2/16] 0.0, 128
        %712 = vxpose.xlu0.b32.cont [3/16] 0.0, 128
        %713 = vxpose.xlu0.b32.cont [4/16] 0.0, 128
        %714 = vxpose.xlu0.b32.cont [5/16] 0.0, 128
        %715 = vxpose.xlu0.b32.cont [6/16] 0.0, 128
        %716 = vxpose.xlu0.b32.cont [7/16] 0.0, 128
        %717 = vxpose.xlu0.b32.cont [8/16] 0.0, 128
        %718 = vxpose.xlu0.b32.cont [9/16] 0.0, 128
        %719 = vxpose.xlu0.b32.cont [10/16] 0.0, 128
        %720 = vxpose.xlu0.b32.cont [11/16] 0.0, 128
        %721 = vxpose.xlu0.b32.cont [12/16] 0.0, 128
        %722 = vxpose.xlu0.b32.cont [13/16] 0.0, 128
        %723 = vxpose.xlu0.b32.cont [14/16] 0.0, 128
        %724 = vxpose.xlu0.b32.cont [15/16] 0.0, 128
        %725 = vxpose.xlu0.b32.end [16/16] 0.0, 128
        %v726 = vpop.trf.xlu0
        %v727 = vpop.trf.xlu0
        %v728 = vpop.trf.xlu0
        %v729 = vpop.trf.xlu0
        %v730 = vpop.trf.xlu0
        %v731 = vpop.trf.xlu0
        %v732 = vpop.trf.xlu0
        %v733 = vpop.trf.xlu0
        %v734 = vpop.trf.xlu0
        %v735 = vpop.trf.xlu0
        %v736 = vpop.trf.xlu0
        %v737 = vpop.trf.xlu0
        %v738 = vpop.trf.xlu0
        %v739 = vpop.trf.xlu0
        %v740 = vpop.trf.xlu0
        %v741 = vpop.trf.xlu0
        %742 = vxpose.xlu0.b32.start [1/16] %v500, 128
        %743 = vxpose.xlu0.b32.cont [2/16] 0.0, 128
        %744 = vxpose.xlu0.b32.cont [3/16] 0.0, 128
        %745 = vxpose.xlu0.b32.cont [4/16] 0.0, 128
        %746 = vxpose.xlu0.b32.cont [5/16] 0.0, 128
        %747 = vxpose.xlu0.b32.cont [6/16] 0.0, 128
        %748 = vxpose.xlu0.b32.cont [7/16] 0.0, 128
        %749 = vxpose.xlu0.b32.cont [8/16] 0.0, 128
        %750 = vxpose.xlu0.b32.cont [9/16] 0.0, 128
        %751 = vxpose.xlu0.b32.cont [10/16] 0.0, 128
        %752 = vxpose.xlu0.b32.cont [11/16] 0.0, 128
        %753 = vxpose.xlu0.b32.cont [12/16] 0.0, 128
        %754 = vxpose.xlu0.b32.cont [13/16] 0.0, 128
        %755 = vxpose.xlu0.b32.cont [14/16] 0.0, 128
        %756 = vxpose.xlu0.b32.cont [15/16] 0.0, 128
        %757 = vxpose.xlu0.b32.end [16/16] 0.0, 128
        %v758 = vpop.trf.xlu0
        %v759 = vpop.trf.xlu0
        %v760 = vpop.trf.xlu0
        %v761 = vpop.trf.xlu0
        %v762 = vpop.trf.xlu0
        %v763 = vpop.trf.xlu0
        %v764 = vpop.trf.xlu0
        %v765 = vpop.trf.xlu0
        %v766 = vpop.trf.xlu0
        %v767 = vpop.trf.xlu0
        %v768 = vpop.trf.xlu0
        %v769 = vpop.trf.xlu0
        %v770 = vpop.trf.xlu0
        %v771 = vpop.trf.xlu0
        %v772 = vpop.trf.xlu0
        %v773 = vpop.trf.xlu0
        %774 = vxpose.xlu0.b32.start [1/16] %v518, 128
        %775 = vxpose.xlu0.b32.cont [2/16] 0.0, 128
        %776 = vxpose.xlu0.b32.cont [3/16] 0.0, 128
        %777 = vxpose.xlu0.b32.cont [4/16] 0.0, 128
        %778 = vxpose.xlu0.b32.cont [5/16] 0.0, 128
        %779 = vxpose.xlu0.b32.cont [6/16] 0.0, 128
        %780 = vxpose.xlu0.b32.cont [7/16] 0.0, 128
        %781 = vxpose.xlu0.b32.cont [8/16] 0.0, 128
        %782 = vxpose.xlu0.b32.cont [9/16] 0.0, 128
        %783 = vxpose.xlu0.b32.cont [10/16] 0.0, 128
        %784 = vxpose.xlu0.b32.cont [11/16] 0.0, 128
        %785 = vxpose.xlu0.b32.cont [12/16] 0.0, 128
        %786 = vxpose.xlu0.b32.cont [13/16] 0.0, 128
        %787 = vxpose.xlu0.b32.cont [14/16] 0.0, 128
        %788 = vxpose.xlu0.b32.cont [15/16] 0.0, 128
        %789 = vxpose.xlu0.b32.end [16/16] 0.0, 128
        %v790 = vpop.trf.xlu0
        %v791 = vpop.trf.xlu0
        %v792 = vpop.trf.xlu0
        %v793 = vpop.trf.xlu0
        %v794 = vpop.trf.xlu0
        %v795 = vpop.trf.xlu0
        %v796 = vpop.trf.xlu0
        %v797 = vpop.trf.xlu0
        %v798 = vpop.trf.xlu0
        %v799 = vpop.trf.xlu0
        %v800 = vpop.trf.xlu0
        %v801 = vpop.trf.xlu0
        %v802 = vpop.trf.xlu0
        %v803 = vpop.trf.xlu0
        %v804 = vpop.trf.xlu0
        %v805 = vpop.trf.xlu0
        %806 = vxpose.xlu0.b32.start [1/16] %v509, 128
        %807 = vxpose.xlu0.b32.cont [2/16] 0.0, 128
        %808 = vxpose.xlu0.b32.cont [3/16] 0.0, 128
        %809 = vxpose.xlu0.b32.cont [4/16] 0.0, 128
        %810 = vxpose.xlu0.b32.cont [5/16] 0.0, 128
        %811 = vxpose.xlu0.b32.cont [6/16] 0.0, 128
        %812 = vxpose.xlu0.b32.cont [7/16] 0.0, 128
        %813 = vxpose.xlu0.b32.cont [8/16] 0.0, 128
        %814 = vxpose.xlu0.b32.cont [9/16] 0.0, 128
        %815 = vxpose.xlu0.b32.cont [10/16] 0.0, 128
        %816 = vxpose.xlu0.b32.cont [11/16] 0.0, 128
        %817 = vxpose.xlu0.b32.cont [12/16] 0.0, 128
        %818 = vxpose.xlu0.b32.cont [13/16] 0.0, 128
        %819 = vxpose.xlu0.b32.cont [14/16] 0.0, 128
        %820 = vxpose.xlu0.b32.cont [15/16] 0.0, 128
        %821 = vxpose.xlu0.b32.end [16/16] 0.0, 128
        %v822 = vpop.trf.xlu0
        %v823 = vpop.trf.xlu0
        %v824 = vpop.trf.xlu0
        %v825 = vpop.trf.xlu0
        %v826 = vpop.trf.xlu0
        %v827 = vpop.trf.xlu0
        %v828 = vpop.trf.xlu0
        %v829 = vpop.trf.xlu0
        %v830 = vpop.trf.xlu0
        %v831 = vpop.trf.xlu0
        %v832 = vpop.trf.xlu0
        %v833 = vpop.trf.xlu0
        %v834 = vpop.trf.xlu0
        %v835 = vpop.trf.xlu0
        %v836 = vpop.trf.xlu0
        %v837 = vpop.trf.xlu0
        %838 = vxpose.xlu0.b32.start [1/16] %v519, 128
        %839 = vxpose.xlu0.b32.cont [2/16] 0.0, 128
        %840 = vxpose.xlu0.b32.cont [3/16] 0.0, 128
        %841 = vxpose.xlu0.b32.cont [4/16] 0.0, 128
        %842 = vxpose.xlu0.b32.cont [5/16] 0.0, 128
        %843 = vxpose.xlu0.b32.cont [6/16] 0.0, 128
        %844 = vxpose.xlu0.b32.cont [7/16] 0.0, 128
        %845 = vxpose.xlu0.b32.cont [8/16] 0.0, 128
        %846 = vxpose.xlu0.b32.cont [9/16] 0.0, 128
        %847 = vxpose.xlu0.b32.cont [10/16] 0.0, 128
        %848 = vxpose.xlu0.b32.cont [11/16] 0.0, 128
        %849 = vxpose.xlu0.b32.cont [12/16] 0.0, 128
        %850 = vxpose.xlu0.b32.cont [13/16] 0.0, 128
        %851 = vxpose.xlu0.b32.cont [14/16] 0.0, 128
        %852 = vxpose.xlu0.b32.cont [15/16] 0.0, 128
        %853 = vxpose.xlu0.b32.end [16/16] 0.0, 128
        %v854 = vpop.trf.xlu0
        %v855 = vpop.trf.xlu0
        %v856 = vpop.trf.xlu0
        %v857 = vpop.trf.xlu0
        %v858 = vpop.trf.xlu0
        %v859 = vpop.trf.xlu0
        %v860 = vpop.trf.xlu0
        %v861 = vpop.trf.xlu0
        %v862 = vpop.trf.xlu0
        %v863 = vpop.trf.xlu0
        %v864 = vpop.trf.xlu0
        %v865 = vpop.trf.xlu0
        %v866 = vpop.trf.xlu0
        %v867 = vpop.trf.xlu0
        %v868 = vpop.trf.xlu0
        %v869 = vpop.trf.xlu0
        %870 = vxpose.xlu0.b32.start [1/16] %v516, 128
        %871 = vxpose.xlu0.b32.cont [2/16] 0.0, 128
        %872 = vxpose.xlu0.b32.cont [3/16] 0.0, 128
        %873 = vxpose.xlu0.b32.cont [4/16] 0.0, 128
        %874 = vxpose.xlu0.b32.cont [5/16] 0.0, 128
        %875 = vxpose.xlu0.b32.cont [6/16] 0.0, 128
        %876 = vxpose.xlu0.b32.cont [7/16] 0.0, 128
        %877 = vxpose.xlu0.b32.cont [8/16] 0.0, 128
        %878 = vxpose.xlu0.b32.cont [9/16] 0.0, 128
        %879 = vxpose.xlu0.b32.cont [10/16] 0.0, 128
        %880 = vxpose.xlu0.b32.cont [11/16] 0.0, 128
        %881 = vxpose.xlu0.b32.cont [12/16] 0.0, 128
        %882 = vxpose.xlu0.b32.cont [13/16] 0.0, 128
        %883 = vxpose.xlu0.b32.cont [14/16] 0.0, 128
        %884 = vxpose.xlu0.b32.cont [15/16] 0.0, 128
        %885 = vxpose.xlu0.b32.end [16/16] 0.0, 128
        %v886 = vpop.trf.xlu0
        %v887 = vpop.trf.xlu0
        %v888 = vpop.trf.xlu0
        %v889 = vpop.trf.xlu0
        %v890 = vpop.trf.xlu0
        %v891 = vpop.trf.xlu0
        %v892 = vpop.trf.xlu0
        %v893 = vpop.trf.xlu0
        %v894 = vpop.trf.xlu0
        %v895 = vpop.trf.xlu0
        %v896 = vpop.trf.xlu0
        %v897 = vpop.trf.xlu0
        %v898 = vpop.trf.xlu0
        %v899 = vpop.trf.xlu0
        %v900 = vpop.trf.xlu0
        %v901 = vpop.trf.xlu0
        %902 = vxpose.xlu0.b32.start [1/16] %v520, 128
        %903 = vxpose.xlu0.b32.cont [2/16] 0.0, 128
        %904 = vxpose.xlu0.b32.cont [3/16] 0.0, 128
        %905 = vxpose.xlu0.b32.cont [4/16] 0.0, 128
        %906 = vxpose.xlu0.b32.cont [5/16] 0.0, 128
        %907 = vxpose.xlu0.b32.cont [6/16] 0.0, 128
        %908 = vxpose.xlu0.b32.cont [7/16] 0.0, 128
        %909 = vxpose.xlu0.b32.cont [8/16] 0.0, 128
        %910 = vxpose.xlu0.b32.cont [9/16] 0.0, 128
        %911 = vxpose.xlu0.b32.cont [10/16] 0.0, 128
        %912 = vxpose.xlu0.b32.cont [11/16] 0.0, 128
        %913 = vxpose.xlu0.b32.cont [12/16] 0.0, 128
        %914 = vxpose.xlu0.b32.cont [13/16] 0.0, 128
        %915 = vxpose.xlu0.b32.cont [14/16] 0.0, 128
        %916 = vxpose.xlu0.b32.cont [15/16] 0.0, 128
        %917 = vxpose.xlu0.b32.end [16/16] 0.0, 128
        %v918 = vpop.trf.xlu0
        %v919 = vpop.trf.xlu0
        %v920 = vpop.trf.xlu0
        %v921 = vpop.trf.xlu0
        %v922 = vpop.trf.xlu0
        %v923 = vpop.trf.xlu0
        %v924 = vpop.trf.xlu0
        %v925 = vpop.trf.xlu0
        %v926 = vpop.trf.xlu0
        %v927 = vpop.trf.xlu0
        %v928 = vpop.trf.xlu0
        %v929 = vpop.trf.xlu0
        %v930 = vpop.trf.xlu0
        %v931 = vpop.trf.xlu0
        %v932 = vpop.trf.xlu0
        %v933 = vpop.trf.xlu0
        %v934 = vcombine.low %v694, %v758
        %v935 = vcombine.high %v694, %v758
        %v937 = vunpack.c.l.s4 1983009808
        %v938 = vunpack.c.0.s8 %v937
        %v939 = vlaneseq
        %v940 = vshrl.u32 %v939, 7
        %v941 = vsub.s32 %v938, %v940
        %v942 = vrot.slane %v934, %v941
        %v944 = vunpack.c.l.s4 1983009808
        %v945 = vunpack.c.0.s8 %v944
        %v946 = vlaneseq
        %v947 = vshrl.u32 %v946, 7
        %v948 = vsub.s32 %v945, %v947
        %v949 = vrot.slane %v935, %v948
        %v950 = vcombine.low %v726, %v790
        %v951 = vcombine.high %v726, %v790
        %v953 = vunpack.c.l.s4 1983009808
        %v954 = vunpack.c.0.s8 %v953
        %v955 = vlaneseq
        %v956 = vshrl.u32 %v955, 7
        %v957 = vsub.s32 %v954, %v956
        %v958 = vrot.slane %v950, %v957
        %v960 = vunpack.c.l.s4 1983009808
        %v961 = vunpack.c.0.s8 %v960
        %v962 = vlaneseq
        %v963 = vshrl.u32 %v962, 7
        %v964 = vsub.s32 %v961, %v963
        %v965 = vrot.slane %v951, %v964
        %v966 = vcombine.low %v822, %v886
        %v967 = vcombine.high %v822, %v886
        %v969 = vunpack.c.l.s4 1983009808
        %v970 = vunpack.c.0.s8 %v969
        %v971 = vlaneseq
        %v972 = vshrl.u32 %v971, 7
        %v973 = vsub.s32 %v970, %v972
        %v974 = vrot.slane %v966, %v973
        %v976 = vunpack.c.l.s4 1983009808
        %v977 = vunpack.c.0.s8 %v976
        %v978 = vlaneseq
        %v979 = vshrl.u32 %v978, 7
        %v980 = vsub.s32 %v977, %v979
        %v981 = vrot.slane %v967, %v980
        %v982 = vcombine.low %v854, %v918
        %v983 = vcombine.high %v854, %v918
        %v985 = vunpack.c.l.s4 1983009808
        %v986 = vunpack.c.0.s8 %v985
        %v987 = vlaneseq
        %v988 = vshrl.u32 %v987, 7
        %v989 = vsub.s32 %v986, %v988
        %v990 = vrot.slane %v982, %v989
        %v992 = vunpack.c.l.s4 1983009808
        %v993 = vunpack.c.0.s8 %v992
        %v994 = vlaneseq
        %v995 = vshrl.u32 %v994, 7
        %v996 = vsub.s32 %v993, %v995
        %v997 = vrot.slane %v983, %v996
        %v998 = vcombine.low %v942, %v958
        %v999 = vcombine.high %v942, %v958
        %v1001 = vunpack.c.l.s4 1934713408
        %v1002 = vunpack.c.0.s8 %v1001
        %v1003 = vlaneseq
        %v1004 = vshrl.u32 %v1003, 7
        %v1005 = vsub.s32 %v1002, %v1004
        %v1006 = vrot.slane %v998, %v1005
        %v1008 = vunpack.c.l.s4 1934713408
        %v1009 = vunpack.c.0.s8 %v1008
        %v1010 = vlaneseq
        %v1011 = vshrl.u32 %v1010, 7
        %v1012 = vsub.s32 %v1009, %v1011
        %v1013 = vrot.slane %v999, %v1012
        %v1014 = vcombine.low %v949, %v965
        %v1015 = vcombine.high %v949, %v965
        %v1017 = vunpack.c.l.s4 1934713408
        %v1018 = vunpack.c.0.s8 %v1017
        %v1019 = vlaneseq
        %v1020 = vshrl.u32 %v1019, 7
        %v1021 = vsub.s32 %v1018, %v1020
        %v1022 = vrot.slane %v1014, %v1021
        %v1024 = vunpack.c.l.s4 1934713408
        %v1025 = vunpack.c.0.s8 %v1024
        %v1026 = vlaneseq
        %v1027 = vshrl.u32 %v1026, 7
        %v1028 = vsub.s32 %v1025, %v1027
        %v1029 = vrot.slane %v1015, %v1028
        %v1030 = vcombine.low %v974, %v990
        %v1031 = vcombine.high %v974, %v990
        %v1033 = vunpack.c.l.s4 1934713408
        %v1034 = vunpack.c.0.s8 %v1033
        %v1035 = vlaneseq
        %v1036 = vshrl.u32 %v1035, 7
        %v1037 = vsub.s32 %v1034, %v1036
        %v1038 = vrot.slane %v1030, %v1037
        %v1040 = vunpack.c.l.s4 1934713408
        %v1041 = vunpack.c.0.s8 %v1040
        %v1042 = vlaneseq
        %v1043 = vshrl.u32 %v1042, 7
        %v1044 = vsub.s32 %v1041, %v1043
        %v1045 = vrot.slane %v1031, %v1044
        %v1046 = vcombine.low %v981, %v997
        %v1047 = vcombine.high %v981, %v997
        %v1049 = vunpack.c.l.s4 1934713408
        %v1050 = vunpack.c.0.s8 %v1049
        %v1051 = vlaneseq
        %v1052 = vshrl.u32 %v1051, 7
        %v1053 = vsub.s32 %v1050, %v1052
        %v1054 = vrot.slane %v1046, %v1053
        %v1056 = vunpack.c.l.s4 1934713408
        %v1057 = vunpack.c.0.s8 %v1056
        %v1058 = vlaneseq
        %v1059 = vshrl.u32 %v1058, 7
        %v1060 = vsub.s32 %v1057, %v1059
        %v1061 = vrot.slane %v1047, %v1060
        %v1062 = vcombine.low %v1006, %v1038
        %v1063 = vcombine.high %v1006, %v1038
        %v1064 = vcombine.low %v1013, %v1045
        %v1065 = vcombine.high %v1013, %v1045
        %v1066 = vcombine.low %v1022, %v1054
        %v1067 = vcombine.high %v1022, %v1054
        %v1068 = vcombine.low %v1029, %v1061
        %v1069 = vcombine.high %v1029, %v1061
        %1070 = vxpose.xlu0.b32.start [1/16] %v1062, 128
        %1071 = vxpose.xlu0.b32.cont [2/16] 0.0, 128
        %1072 = vxpose.xlu0.b32.cont [3/16] 0.0, 128
        %1073 = vxpose.xlu0.b32.cont [4/16] 0.0, 128
        %1074 = vxpose.xlu0.b32.cont [5/16] 0.0, 128
        %1075 = vxpose.xlu0.b32.cont [6/16] 0.0, 128
        %1076 = vxpose.xlu0.b32.cont [7/16] 0.0, 128
        %1077 = vxpose.xlu0.b32.cont [8/16] 0.0, 128
        %1078 = vxpose.xlu0.b32.cont [9/16] 0.0, 128
        %1079 = vxpose.xlu0.b32.cont [10/16] 0.0, 128
        %1080 = vxpose.xlu0.b32.cont [11/16] 0.0, 128
        %1081 = vxpose.xlu0.b32.cont [12/16] 0.0, 128
        %1082 = vxpose.xlu0.b32.cont [13/16] 0.0, 128
        %1083 = vxpose.xlu0.b32.cont [14/16] 0.0, 128
        %1084 = vxpose.xlu0.b32.cont [15/16] 0.0, 128
        %1085 = vxpose.xlu0.b32.end [16/16] 0.0, 128
        %v1086 = vpop.trf.xlu0
        %v1087 = vpop.trf.xlu0
        %v1088 = vpop.trf.xlu0
        %v1089 = vpop.trf.xlu0
        %v1090 = vpop.trf.xlu0
        %v1091 = vpop.trf.xlu0
        %v1092 = vpop.trf.xlu0
        %v1093 = vpop.trf.xlu0
        %v1094 = vpop.trf.xlu0
        %v1095 = vpop.trf.xlu0
        %v1096 = vpop.trf.xlu0
        %v1097 = vpop.trf.xlu0
        %v1098 = vpop.trf.xlu0
        %v1099 = vpop.trf.xlu0
        %v1100 = vpop.trf.xlu0
        %v1101 = vpop.trf.xlu0
        %1102 = vxpose.xlu0.b32.start [1/16] %v1063, 128
        %1103 = vxpose.xlu0.b32.cont [2/16] 0.0, 128
        %1104 = vxpose.xlu0.b32.cont [3/16] 0.0, 128
        %1105 = vxpose.xlu0.b32.cont [4/16] 0.0, 128
        %1106 = vxpose.xlu0.b32.cont [5/16] 0.0, 128
        %1107 = vxpose.xlu0.b32.cont [6/16] 0.0, 128
        %1108 = vxpose.xlu0.b32.cont [7/16] 0.0, 128
        %1109 = vxpose.xlu0.b32.cont [8/16] 0.0, 128
        %1110 = vxpose.xlu0.b32.cont [9/16] 0.0, 128
        %1111 = vxpose.xlu0.b32.cont [10/16] 0.0, 128
        %1112 = vxpose.xlu0.b32.cont [11/16] 0.0, 128
        %1113 = vxpose.xlu0.b32.cont [12/16] 0.0, 128
        %1114 = vxpose.xlu0.b32.cont [13/16] 0.0, 128
        %1115 = vxpose.xlu0.b32.cont [14/16] 0.0, 128
        %1116 = vxpose.xlu0.b32.cont [15/16] 0.0, 128
        %1117 = vxpose.xlu0.b32.end [16/16] 0.0, 128
        %v1118 = vpop.trf.xlu0
        %v1119 = vpop.trf.xlu0
        %v1120 = vpop.trf.xlu0
        %v1121 = vpop.trf.xlu0
        %v1122 = vpop.trf.xlu0
        %v1123 = vpop.trf.xlu0
        %v1124 = vpop.trf.xlu0
        %v1125 = vpop.trf.xlu0
        %v1126 = vpop.trf.xlu0
        %v1127 = vpop.trf.xlu0
        %v1128 = vpop.trf.xlu0
        %v1129 = vpop.trf.xlu0
        %v1130 = vpop.trf.xlu0
        %v1131 = vpop.trf.xlu0
        %v1132 = vpop.trf.xlu0
        %v1133 = vpop.trf.xlu0
        %1134 = vxpose.xlu0.b32.start [1/16] %v1064, 128
        %1135 = vxpose.xlu0.b32.cont [2/16] 0.0, 128
        %1136 = vxpose.xlu0.b32.cont [3/16] 0.0, 128
        %1137 = vxpose.xlu0.b32.cont [4/16] 0.0, 128
        %1138 = vxpose.xlu0.b32.cont [5/16] 0.0, 128
        %1139 = vxpose.xlu0.b32.cont [6/16] 0.0, 128
        %1140 = vxpose.xlu0.b32.cont [7/16] 0.0, 128
        %1141 = vxpose.xlu0.b32.cont [8/16] 0.0, 128
        %1142 = vxpose.xlu0.b32.cont [9/16] 0.0, 128
        %1143 = vxpose.xlu0.b32.cont [10/16] 0.0, 128
        %1144 = vxpose.xlu0.b32.cont [11/16] 0.0, 128
        %1145 = vxpose.xlu0.b32.cont [12/16] 0.0, 128
        %1146 = vxpose.xlu0.b32.cont [13/16] 0.0, 128
        %1147 = vxpose.xlu0.b32.cont [14/16] 0.0, 128
        %1148 = vxpose.xlu0.b32.cont [15/16] 0.0, 128
        %1149 = vxpose.xlu0.b32.end [16/16] 0.0, 128
        %v1150 = vpop.trf.xlu0
        %v1151 = vpop.trf.xlu0
        %v1152 = vpop.trf.xlu0
        %v1153 = vpop.trf.xlu0
        %v1154 = vpop.trf.xlu0
        %v1155 = vpop.trf.xlu0
        %v1156 = vpop.trf.xlu0
        %v1157 = vpop.trf.xlu0
        %v1158 = vpop.trf.xlu0
        %v1159 = vpop.trf.xlu0
        %v1160 = vpop.trf.xlu0
        %v1161 = vpop.trf.xlu0
        %v1162 = vpop.trf.xlu0
        %v1163 = vpop.trf.xlu0
        %v1164 = vpop.trf.xlu0
        %v1165 = vpop.trf.xlu0
        %1166 = vxpose.xlu0.b32.start [1/16] %v1065, 128
        %1167 = vxpose.xlu0.b32.cont [2/16] 0.0, 128
        %1168 = vxpose.xlu0.b32.cont [3/16] 0.0, 128
        %1169 = vxpose.xlu0.b32.cont [4/16] 0.0, 128
        %1170 = vxpose.xlu0.b32.cont [5/16] 0.0, 128
        %1171 = vxpose.xlu0.b32.cont [6/16] 0.0, 128
        %1172 = vxpose.xlu0.b32.cont [7/16] 0.0, 128
        %1173 = vxpose.xlu0.b32.cont [8/16] 0.0, 128
        %1174 = vxpose.xlu0.b32.cont [9/16] 0.0, 128
        %1175 = vxpose.xlu0.b32.cont [10/16] 0.0, 128
        %1176 = vxpose.xlu0.b32.cont [11/16] 0.0, 128
        %1177 = vxpose.xlu0.b32.cont [12/16] 0.0, 128
        %1178 = vxpose.xlu0.b32.cont [13/16] 0.0, 128
        %1179 = vxpose.xlu0.b32.cont [14/16] 0.0, 128
        %1180 = vxpose.xlu0.b32.cont [15/16] 0.0, 128
        %1181 = vxpose.xlu0.b32.end [16/16] 0.0, 128
        %v1182 = vpop.trf.xlu0
        %v1183 = vpop.trf.xlu0
        %v1184 = vpop.trf.xlu0
        %v1185 = vpop.trf.xlu0
        %v1186 = vpop.trf.xlu0
        %v1187 = vpop.trf.xlu0
        %v1188 = vpop.trf.xlu0
        %v1189 = vpop.trf.xlu0
        %v1190 = vpop.trf.xlu0
        %v1191 = vpop.trf.xlu0
        %v1192 = vpop.trf.xlu0
        %v1193 = vpop.trf.xlu0
        %v1194 = vpop.trf.xlu0
        %v1195 = vpop.trf.xlu0
        %v1196 = vpop.trf.xlu0
        %v1197 = vpop.trf.xlu0
        %1198 = vxpose.xlu0.b32.start [1/16] %v1066, 128
        %1199 = vxpose.xlu0.b32.cont [2/16] 0.0, 128
        %1200 = vxpose.xlu0.b32.cont [3/16] 0.0, 128
        %1201 = vxpose.xlu0.b32.cont [4/16] 0.0, 128
        %1202 = vxpose.xlu0.b32.cont [5/16] 0.0, 128
        %1203 = vxpose.xlu0.b32.cont [6/16] 0.0, 128
        %1204 = vxpose.xlu0.b32.cont [7/16] 0.0, 128
        %1205 = vxpose.xlu0.b32.cont [8/16] 0.0, 128
        %1206 = vxpose.xlu0.b32.cont [9/16] 0.0, 128
        %1207 = vxpose.xlu0.b32.cont [10/16] 0.0, 128
        %1208 = vxpose.xlu0.b32.cont [11/16] 0.0, 128
        %1209 = vxpose.xlu0.b32.cont [12/16] 0.0, 128
        %1210 = vxpose.xlu0.b32.cont [13/16] 0.0, 128
        %1211 = vxpose.xlu0.b32.cont [14/16] 0.0, 128
        %1212 = vxpose.xlu0.b32.cont [15/16] 0.0, 128
        %1213 = vxpose.xlu0.b32.end [16/16] 0.0, 128
        %v1214 = vpop.trf.xlu0
        %v1215 = vpop.trf.xlu0
        %v1216 = vpop.trf.xlu0
        %v1217 = vpop.trf.xlu0
        %v1218 = vpop.trf.xlu0
        %v1219 = vpop.trf.xlu0
        %v1220 = vpop.trf.xlu0
        %v1221 = vpop.trf.xlu0
        %v1222 = vpop.trf.xlu0
        %v1223 = vpop.trf.xlu0
        %v1224 = vpop.trf.xlu0
        %v1225 = vpop.trf.xlu0
        %v1226 = vpop.trf.xlu0
        %v1227 = vpop.trf.xlu0
        %v1228 = vpop.trf.xlu0
        %v1229 = vpop.trf.xlu0
        %1230 = vxpose.xlu0.b32.start [1/16] %v1067, 128
        %1231 = vxpose.xlu0.b32.cont [2/16] 0.0, 128
        %1232 = vxpose.xlu0.b32.cont [3/16] 0.0, 128
        %1233 = vxpose.xlu0.b32.cont [4/16] 0.0, 128
        %1234 = vxpose.xlu0.b32.cont [5/16] 0.0, 128
        %1235 = vxpose.xlu0.b32.cont [6/16] 0.0, 128
        %1236 = vxpose.xlu0.b32.cont [7/16] 0.0, 128
        %1237 = vxpose.xlu0.b32.cont [8/16] 0.0, 128
        %1238 = vxpose.xlu0.b32.cont [9/16] 0.0, 128
        %1239 = vxpose.xlu0.b32.cont [10/16] 0.0, 128
        %1240 = vxpose.xlu0.b32.cont [11/16] 0.0, 128
        %1241 = vxpose.xlu0.b32.cont [12/16] 0.0, 128
        %1242 = vxpose.xlu0.b32.cont [13/16] 0.0, 128
        %1243 = vxpose.xlu0.b32.cont [14/16] 0.0, 128
        %1244 = vxpose.xlu0.b32.cont [15/16] 0.0, 128
        %1245 = vxpose.xlu0.b32.end [16/16] 0.0, 128
        %v1246 = vpop.trf.xlu0
        %v1247 = vpop.trf.xlu0
        %v1248 = vpop.trf.xlu0
        %v1249 = vpop.trf.xlu0
        %v1250 = vpop.trf.xlu0
        %v1251 = vpop.trf.xlu0
        %v1252 = vpop.trf.xlu0
        %v1253 = vpop.trf.xlu0
        %v1254 = vpop.trf.xlu0
        %v1255 = vpop.trf.xlu0
        %v1256 = vpop.trf.xlu0
        %v1257 = vpop.trf.xlu0
        %v1258 = vpop.trf.xlu0
        %v1259 = vpop.trf.xlu0
        %v1260 = vpop.trf.xlu0
        %v1261 = vpop.trf.xlu0
        %1262 = vxpose.xlu0.b32.start [1/16] %v1068, 128
        %1263 = vxpose.xlu0.b32.cont [2/16] 0.0, 128
        %1264 = vxpose.xlu0.b32.cont [3/16] 0.0, 128
        %1265 = vxpose.xlu0.b32.cont [4/16] 0.0, 128
        %1266 = vxpose.xlu0.b32.cont [5/16] 0.0, 128
        %1267 = vxpose.xlu0.b32.cont [6/16] 0.0, 128
        %1268 = vxpose.xlu0.b32.cont [7/16] 0.0, 128
        %1269 = vxpose.xlu0.b32.cont [8/16] 0.0, 128
        %1270 = vxpose.xlu0.b32.cont [9/16] 0.0, 128
        %1271 = vxpose.xlu0.b32.cont [10/16] 0.0, 128
        %1272 = vxpose.xlu0.b32.cont [11/16] 0.0, 128
        %1273 = vxpose.xlu0.b32.cont [12/16] 0.0, 128
        %1274 = vxpose.xlu0.b32.cont [13/16] 0.0, 128
        %1275 = vxpose.xlu0.b32.cont [14/16] 0.0, 128
        %1276 = vxpose.xlu0.b32.cont [15/16] 0.0, 128
        %1277 = vxpose.xlu0.b32.end [16/16] 0.0, 128
        %v1278 = vpop.trf.xlu0
        %v1279 = vpop.trf.xlu0
        %v1280 = vpop.trf.xlu0
        %v1281 = vpop.trf.xlu0
        %v1282 = vpop.trf.xlu0
        %v1283 = vpop.trf.xlu0
        %v1284 = vpop.trf.xlu0
        %v1285 = vpop.trf.xlu0
        %v1286 = vpop.trf.xlu0
        %v1287 = vpop.trf.xlu0
        %v1288 = vpop.trf.xlu0
        %v1289 = vpop.trf.xlu0
        %v1290 = vpop.trf.xlu0
        %v1291 = vpop.trf.xlu0
        %v1292 = vpop.trf.xlu0
        %v1293 = vpop.trf.xlu0
        %1294 = vxpose.xlu0.b32.start [1/16] %v1069, 128
        %1295 = vxpose.xlu0.b32.cont [2/16] 0.0, 128
        %1296 = vxpose.xlu0.b32.cont [3/16] 0.0, 128
        %1297 = vxpose.xlu0.b32.cont [4/16] 0.0, 128
        %1298 = vxpose.xlu0.b32.cont [5/16] 0.0, 128
        %1299 = vxpose.xlu0.b32.cont [6/16] 0.0, 128
        %1300 = vxpose.xlu0.b32.cont [7/16] 0.0, 128
        %1301 = vxpose.xlu0.b32.cont [8/16] 0.0, 128
        %1302 = vxpose.xlu0.b32.cont [9/16] 0.0, 128
        %1303 = vxpose.xlu0.b32.cont [10/16] 0.0, 128
        %1304 = vxpose.xlu0.b32.cont [11/16] 0.0, 128
        %1305 = vxpose.xlu0.b32.cont [12/16] 0.0, 128
        %1306 = vxpose.xlu0.b32.cont [13/16] 0.0, 128
        %1307 = vxpose.xlu0.b32.cont [14/16] 0.0, 128
        %1308 = vxpose.xlu0.b32.cont [15/16] 0.0, 128
        %1309 = vxpose.xlu0.b32.end [16/16] 0.0, 128
        %v1310 = vpop.trf.xlu0
        %v1311 = vpop.trf.xlu0
        %v1312 = vpop.trf.xlu0
        %v1313 = vpop.trf.xlu0
        %v1314 = vpop.trf.xlu0
        %v1315 = vpop.trf.xlu0
        %v1316 = vpop.trf.xlu0
        %v1317 = vpop.trf.xlu0
        %v1318 = vpop.trf.xlu0
        %v1319 = vpop.trf.xlu0
        %v1320 = vpop.trf.xlu0
        %v1321 = vpop.trf.xlu0
        %v1322 = vpop.trf.xlu0
        %v1323 = vpop.trf.xlu0
        %v1324 = vpop.trf.xlu0
        %v1325 = vpop.trf.xlu0
        %v1326 = vcombine.low %v1086, %v1150
        %v1328 = vunpack.c.l.s4 1983009808
        %v1329 = vunpack.c.0.s8 %v1328
        %v1330 = vlaneseq
        %v1331 = vshrl.u32 %v1330, 7
        %v1332 = vsub.s32 %v1329, %v1331
        %v1333 = vrot.slane %v1326, %v1332
        %v1334 = vcombine.low %v1118, %v1182
        %v1336 = vunpack.c.l.s4 1983009808
        %v1337 = vunpack.c.0.s8 %v1336
        %v1338 = vlaneseq
        %v1339 = vshrl.u32 %v1338, 7
        %v1340 = vsub.s32 %v1337, %v1339
        %v1341 = vrot.slane %v1334, %v1340
        %v1342 = vcombine.low %v1214, %v1278
        %v1344 = vunpack.c.l.s4 1983009808
        %v1345 = vunpack.c.0.s8 %v1344
        %v1346 = vlaneseq
        %v1347 = vshrl.u32 %v1346, 7
        %v1348 = vsub.s32 %v1345, %v1347
        %v1349 = vrot.slane %v1342, %v1348
        %v1350 = vcombine.low %v1246, %v1310
        %v1352 = vunpack.c.l.s4 1983009808
        %v1353 = vunpack.c.0.s8 %v1352
        %v1354 = vlaneseq
        %v1355 = vshrl.u32 %v1354, 7
        %v1356 = vsub.s32 %v1353, %v1355
        %v1357 = vrot.slane %v1350, %v1356
        %v1358 = vcombine.low %v1333, %v1341
        %v1359 = vcombine.high %v1333, %v1341
        %v1361 = vunpack.c.l.s4 1934713408
        %v1362 = vunpack.c.0.s8 %v1361
        %v1363 = vlaneseq
        %v1364 = vshrl.u32 %v1363, 7
        %v1365 = vsub.s32 %v1362, %v1364
        %v1366 = vrot.slane %v1358, %v1365
        %v1368 = vunpack.c.l.s4 1934713408
        %v1369 = vunpack.c.0.s8 %v1368
        %v1370 = vlaneseq
        %v1371 = vshrl.u32 %v1370, 7
        %v1372 = vsub.s32 %v1369, %v1371
        %v1373 = vrot.slane %v1359, %v1372
        %v1374 = vcombine.low %v1349, %v1357
        %v1375 = vcombine.high %v1349, %v1357
        %v1377 = vunpack.c.l.s4 1934713408
        %v1378 = vunpack.c.0.s8 %v1377
        %v1379 = vlaneseq
        %v1380 = vshrl.u32 %v1379, 7
        %v1381 = vsub.s32 %v1378, %v1380
        %v1382 = vrot.slane %v1374, %v1381
        %v1384 = vunpack.c.l.s4 1934713408
        %v1385 = vunpack.c.0.s8 %v1384
        %v1386 = vlaneseq
        %v1387 = vshrl.u32 %v1386, 7
        %v1388 = vsub.s32 %v1385, %v1387
        %v1389 = vrot.slane %v1375, %v1388
        %v1390 = vcombine.low %v1366, %v1382
        %v1391 = vcombine.high %v1366, %v1382
        %v1392 = vcombine.low %v1373, %v1389
        %v1393 = vcombine.high %v1373, %v1389
        %v1394 = vpack.c.bf16 %v1390, %v1390
        %v1395 = vpack.c.bf16 %v1391, %v1391
        %v1396 = vpack.c.bf16 %v1392, %v1392
        %v1397 = vpack.c.bf16 %v1393, %v1393
        %1398 = vst.msk [vmem:[%s286] sm:$0xf] %vm673, %v1394
        %1399 = vst.msk [vmem:[%s286 + $0x4] sm:$0xf] %vm673, %v1395
        %1400 = vst.msk [vmem:[%s286 + $0x8] sm:$0xf] %vm673, %v1396
        %1401 = vst.msk [vmem:[%s286 + $0xc] sm:$0xf] %vm673, %v1397
        %v1402 = vcombine.low %v573, %v580
        %v1404 = vunpack.c.l.s4 1983009808
        %v1405 = vunpack.c.0.s8 %v1404
        %v1406 = vlaneseq
        %v1407 = vshrl.u32 %v1406, 7
        %v1408 = vsub.s32 %v1405, %v1407
        %v1409 = vrot.slane %v1402, %v1408
        %v1410 = vcombine.low %v597, %v598
        %v1412 = vunpack.c.l.s4 1983009808
        %v1413 = vunpack.c.0.s8 %v1412
        %v1414 = vlaneseq
        %v1415 = vshrl.u32 %v1414, 7
        %v1416 = vsub.s32 %v1413, %v1415
        %v1417 = vrot.slane %v1410, %v1416
        %v1418 = vcombine.low %v589, %v596
        %v1420 = vunpack.c.l.s4 1983009808
        %v1421 = vunpack.c.0.s8 %v1420
        %v1422 = vlaneseq
        %v1423 = vshrl.u32 %v1422, 7
        %v1424 = vsub.s32 %v1421, %v1423
        %v1425 = vrot.slane %v1418, %v1424
        %v1426 = vcombine.low %v599, %v600
        %v1428 = vunpack.c.l.s4 1983009808
        %v1429 = vunpack.c.0.s8 %v1428
        %v1430 = vlaneseq
        %v1431 = vshrl.u32 %v1430, 7
        %v1432 = vsub.s32 %v1429, %v1431
        %v1433 = vrot.slane %v1426, %v1432
        %v1434 = vcombine.low %v1409, %v1417
        %v1435 = vcombine.high %v1409, %v1417
        %v1437 = vunpack.c.l.s4 1934713408
        %v1438 = vunpack.c.0.s8 %v1437
        %v1439 = vlaneseq
        %v1440 = vshrl.u32 %v1439, 7
        %v1441 = vsub.s32 %v1438, %v1440
        %v1442 = vrot.slane %v1434, %v1441
        %v1444 = vunpack.c.l.s4 1934713408
        %v1445 = vunpack.c.0.s8 %v1444
        %v1446 = vlaneseq
        %v1447 = vshrl.u32 %v1446, 7
        %v1448 = vsub.s32 %v1445, %v1447
        %v1449 = vrot.slane %v1435, %v1448
        %v1450 = vcombine.low %v1425, %v1433
        %v1451 = vcombine.high %v1425, %v1433
        %v1453 = vunpack.c.l.s4 1934713408
        %v1454 = vunpack.c.0.s8 %v1453
        %v1455 = vlaneseq
        %v1456 = vshrl.u32 %v1455, 7
        %v1457 = vsub.s32 %v1454, %v1456
        %v1458 = vrot.slane %v1450, %v1457
        %v1460 = vunpack.c.l.s4 1934713408
        %v1461 = vunpack.c.0.s8 %v1460
        %v1462 = vlaneseq
        %v1463 = vshrl.u32 %v1462, 7
        %v1464 = vsub.s32 %v1461, %v1463
        %v1465 = vrot.slane %v1451, %v1464
        %v1466 = vcombine.low %v1442, %v1458
        %v1467 = vcombine.high %v1442, %v1458
        %v1468 = vcombine.low %v1449, %v1465
        %v1469 = vcombine.high %v1449, %v1465
        %v1470 = vpack.c.bf16 %v1466, %v1466
        %v1471 = vpack.c.bf16 %v1467, %v1467
        %v1472 = vpack.c.bf16 %v1468, %v1468
        %v1473 = vpack.c.bf16 %v1469, %v1469
        %1474 = vst.msk [vmem:[%s293] sm:$0xf] %vm673, %v1470
        %1475 = vst.msk [vmem:[%s293 + $0x4] sm:$0xf] %vm673, %v1471
        %1476 = vst.msk [vmem:[%s293 + $0x8] sm:$0xf] %vm673, %v1472
        %1477 = vst.msk [vmem:[%s293 + $0xc] sm:$0xf] %vm673, %v1473
        %s1478 = sand.u32 %s119, 1
        %s1479 = scalar_lea.sflag [#allocation4], %s1478
        %s1480 = sand.u32 %s119, 1
        %s1481 = smul.addr %s1480, 16
        %s1482 = scalar_lea.vmem [#allocation7], %s1481
        %s1483 = sand.u32 %s27, 1
        %s1484 = scalar_lea.sflag [#allocation9], %s1483
        %s1485 = sand.u32 %s147, 1
        %s1486 = smul.addr %s1485, 16
        %s1487 = scalar_lea.vmem [#allocation8], %s1486
        %s1488 = sand.u32 %s27, 1
        %s1489 = scalar_lea.sflag [#allocation9], %s1488
        %s1490 = sand.u32 %s175, 1
        %s1491 = smul.addr %s1490, 16
        %s1492 = scalar_lea.vmem [#allocation10], %s1491
        // Predicated region
        $region41: #{tpu_custom_call.1} parent=31 // pred_check
          %p1493 = pneg %p129
        $region42: #{tpu_custom_call.1} parent=31 // pred_check_branch
          %1495 = sbr.rel (%p1493) target = $region44
        $region43: #{tpu_custom_call.1} parent=31 // pred_region
          %s1497 = ssub.s32 256, 256
          %1498 = vsyncadd %s1479, %s1497
          %s1499 = smul.addr %s31, 4
          %s1500 = sadd.s32 %s32, %s1499
          %s1501 = smul.addr %s1500, 64
          %s1502 = scalar_lea.hbm %s3, %s1501
          %s1503 = sshll.u32 %s1482, 4
          %s1504 = int_to_ptr.vmem [resolvable:$true] %s1503
          %1509 = dma.vmem_to_hbm [thread:$0]  %s1504, 256, %s1502, %s1479, 64, 64, 4
        $region44: #{tpu_custom_call.1} parent=31 // pred_fallthru
          _
        // Predicated region
        $region45: #{tpu_custom_call.1} parent=31 // pred_check
          %p1510 = pneg %p157
        $region46: #{tpu_custom_call.1} parent=31 // pred_check_branch
          %1512 = sbr.rel (%p1510) target = $region48
        $region47: #{tpu_custom_call.1} parent=31 // pred_region
          %s1514 = ssub.s32 256, 256
          %1515 = vsyncadd %s1484, %s1514
          %s1516 = smul.addr %s31, 4
          %s1517 = sadd.s32 %s32, %s1516
          %s1518 = smul.addr %s1517, 64
          %s1519 = scalar_lea.hbm %s4, %s1518
          %s1520 = sshll.u32 %s1487, 4
          %s1521 = int_to_ptr.vmem [resolvable:$true] %s1520
          %1526 = dma.vmem_to_hbm [thread:$0]  %s1521, 256, %s1519, %s1484, 64, 64, 4
        $region48: #{tpu_custom_call.1} parent=31 // pred_fallthru
          _
        // Predicated region
        $region49: #{tpu_custom_call.1} parent=31 // pred_check
          %p1527 = pneg %p185
        $region50: #{tpu_custom_call.1} parent=31 // pred_check_branch
          %1529 = sbr.rel (%p1527) target = $region52
        $region51: #{tpu_custom_call.1} parent=31 // pred_region
          %s1531 = ssub.s32 256, 256
          %1532 = vsyncadd %s1489, %s1531
          %s1533 = smul.addr %s31, 4
          %s1534 = sadd.s32 %s32, %s1533
          %s1535 = smul.addr %s1534, 64
          %s1536 = scalar_lea.hbm %s5, %s1535
          %s1537 = sshll.u32 %s1492, 4
          %s1538 = int_to_ptr.vmem [resolvable:$true] %s1537
          %1543 = dma.vmem_to_hbm [thread:$0]  %s1538, 256, %s1536, %s1489, 64, 64, 4
        $region52: #{tpu_custom_call.1} parent=31 // pred_fallthru
          _
      $region32: #{tpu_custom_call.1} parent=5 // pred_fallthru
        _
      %p1544 = scmp.le.s32.totalorder 2, %s22
      // Predicated region
      $region53: #{tpu_custom_call.1} parent=5 // pred_check
        %p1545 = pneg %p1544
      $region54: #{tpu_custom_call.1} parent=5 // pred_check_branch
        %1547 = sbr.rel (%p1545) target = $region56
      $region55: #{tpu_custom_call.1} parent=5 // pred_region
        %s1548 = ssub.s32 %s22, 2
        // Predicated region
        $region57: #{tpu_custom_call.1} parent=55 // pred_check
          %p1549 = pneg %p135
        $region58: #{tpu_custom_call.1} parent=55 // pred_check_branch
          %1551 = sbr.rel (%p1549) target = $region60
        $region59: #{tpu_custom_call.1} parent=55 // pred_region
          %s1552 = sand.u32 %s120, 1
          %s1553 = scalar_lea.sflag [#allocation4], %s1552
          %s1554 = sand.u32 %s120, 1
          %s1555 = smul.addr %s1554, 16
          %s1556 = scalar_lea.vmem [#allocation7], %s1555
          %1557 = dma.done %s1553, 256
        $region60: #{tpu_custom_call.1} parent=55 // pred_fallthru
          _
        // Predicated region
        $region61: #{tpu_custom_call.1} parent=55 // pred_check
          %p1558 = pneg %p163
        $region62: #{tpu_custom_call.1} parent=55 // pred_check_branch
          %1560 = sbr.rel (%p1558) target = $region64
        $region63: #{tpu_custom_call.1} parent=55 // pred_region
          %s1561 = sand.u32 %s28, 1
          %s1562 = scalar_lea.sflag [#allocation9], %s1561
          %s1563 = sand.u32 %s148, 1
          %s1564 = smul.addr %s1563, 16
          %s1565 = scalar_lea.vmem [#allocation8], %s1564
          %1566 = dma.done %s1562, 256
        $region64: #{tpu_custom_call.1} parent=55 // pred_fallthru
          _
        // Predicated region
        $region65: #{tpu_custom_call.1} parent=55 // pred_check
          %p1567 = pneg %p191
        $region66: #{tpu_custom_call.1} parent=55 // pred_check_branch
          %1569 = sbr.rel (%p1567) target = $region68
        $region67: #{tpu_custom_call.1} parent=55 // pred_region
          %s1570 = sand.u32 %s28, 1
          %s1571 = scalar_lea.sflag [#allocation9], %s1570
          %s1572 = sand.u32 %s176, 1
          %s1573 = smul.addr %s1572, 16
          %s1574 = scalar_lea.vmem [#allocation10], %s1573
          %1575 = dma.done %s1571, 256
        $region68: #{tpu_custom_call.1} parent=55 // pred_fallthru
          _
      $region56: #{tpu_custom_call.1} parent=5 // pred_fallthru
        _
    $region6: #{tpu_custom_call.1} parent=1 // loop_footer
      %s26 = sadd.s32 1, %s22
    $region7: #{tpu_custom_call.1} parent=1 // loop_footer_branch
      %21 = sbr.rel target = $region3
    $region8: #{tpu_custom_call.1} parent=1 // loop_exit
      _
    %1576 = vsyncpa [#allocation3], 1
    %s1577 = scalar_lea.sflag [#allocation3], 1
    %1578 = vsyncpa %s1577, 1
    %1579 = vsyncpa [#allocation6], 1
    %1580 = vsyncpa [#allocation4], 1
    %s1581 = scalar_lea.sflag [#allocation4], 1
    %1582 = vsyncpa %s1581, 1
    %1583 = vsyncpa [#allocation9], 1
    %s1584 = scalar_lea.sflag [#allocation9], 1
    %1585 = vsyncpa %s1584, 1

</llo_original>
